<compile_context>
chip_gen: v7x
topology: tpu7x:2x2x1
jax: 0.10.0
libtpu: 0.0.40
codegen_flags: <defaults>
</compile_context>

<pallas_src>
import jax
import jax.numpy as jnp
from jax.experimental import pallas as pl
from jax.experimental.pallas import tpu as pltpu


def _round_up(x, m):
    return (x + m - 1) // m * m


def mlp_kernel(x_ref, w1_ref, b1_ref, w2_ref, b2_ref, w3_ref, b3_ref,
               o_ref, xp_ref):
    # x_ref : (TM, 784) f32 raw input tile (pipelined)
    # w*/b* : bf16 weights / f32 biases, VMEM-resident (constant index_map)
    # o_ref : (TM, 128) bf16 lane-dense output tile
    # xp_ref: (TM, 896) bf16 scratch - zero-extended, bf16-cast input
    K = x_ref.shape[1]                 # 784 logical input features
    K_pad = xp_ref.shape[1]            # 896 (7*128)
    k_aligned = (K // 128) * 128       # 768

    # Zero the lane-padding tail with an aligned, full-vreg-width store, then
    # overwrite the first K columns with the bf16-cast input (masked store).
    # Done every grid step so it stays correct when the "parallel" batch grid
    # is split across TensorCores (scratch is per-core).
    if K_pad > k_aligned:
        xp_ref[:, k_aligned:] = jnp.zeros(
            (xp_ref.shape[0], K_pad - k_aligned), xp_ref.dtype)
    xp_ref[:, :K] = x_ref[...].astype(xp_ref.dtype)

    # Three fused MXU matmuls (bf16 in, f32 accumulate), bias + ReLU on VPU.
    h1 = jnp.dot(xp_ref[...], w1_ref[...],
                 preferred_element_type=jnp.float32) + b1_ref[...]
    h1 = jnp.maximum(h1, 0.0).astype(jnp.bfloat16)
    h2 = jnp.dot(h1, w2_ref[...],
                 preferred_element_type=jnp.float32) + b2_ref[...]
    h2 = jnp.maximum(h2, 0.0).astype(jnp.bfloat16)
    h3 = jnp.dot(h2, w3_ref[...],
                 preferred_element_type=jnp.float32) + b3_ref[...]
    o_ref[...] = jnp.maximum(h3, 0.0).astype(o_ref.dtype)


def neural_network_forward(x_nchw, params):
    """x_nchw: (B, 1, 28, 28) float32 -> (B, 10) float32 logits."""
    w1, b1, w2, b2, w3, b3 = params
    B = x_nchw.shape[0]
    x_flat = x_nchw.reshape(B, -1).astype(jnp.float32)               # (B, 784)

    K = x_flat.shape[1]                                              # 784
    H1 = w1.shape[1]                                                 # 512
    H2 = w2.shape[1]                                                 # 512
    N_out = w3.shape[1]                                              # 10
    K_pad = _round_up(K, 128)                                        # 896
    N_pad = _round_up(N_out, 128)                                    # 128

    # Batch tiling: whole batch in one tile for small B (latency path); for
    # large B use tiles up to 512 rows but keep >= 2 grid steps so both v7x
    # TensorCores get work. Rounded to 16 for bf16 sublane packing.
    B16 = _round_up(max(B, 1), 16)
    if B16 <= 256:
        TM = B16
    else:
        TM = min(512, _round_up(-(-B16 // 2), 16))
    B_pad = _round_up(B16, TM)

    # Only pad batch rows when needed (no-op for B a multiple of TM).
    if B_pad != B:
        x_flat = jnp.pad(x_flat, ((0, B_pad - B), (0, 0)))

    # One-time weight prep (tiny vs. activations): bf16 cast, K/N padding.
    w1_p = jnp.pad(w1, ((0, K_pad - K), (0, 0))).astype(jnp.bfloat16)
    w2_b = w2.astype(jnp.bfloat16)
    w3_p = jnp.pad(w3, ((0, 0), (0, N_pad - N_out))).astype(jnp.bfloat16)
    b1_f = b1.astype(jnp.float32)
    b2_f = b2.astype(jnp.float32)
    b3_p = jnp.pad(b3, ((0, 0), (0, N_pad - N_out))).astype(jnp.float32)

    grid = (B_pad // TM,)

    out = pl.pallas_call(
        mlp_kernel,
        out_shape=jax.ShapeDtypeStruct((B_pad, N_pad), jnp.bfloat16),
        grid_spec=pltpu.PrefetchScalarGridSpec(
            num_scalar_prefetch=0,
            grid=grid,
            in_specs=[
                pl.BlockSpec((TM, K), lambda i: (i, 0)),      # raw f32 x tile
                pl.BlockSpec((K_pad, H1), lambda i: (0, 0)),  # weights resident
                pl.BlockSpec((1, H1), lambda i: (0, 0)),
                pl.BlockSpec((H1, H2), lambda i: (0, 0)),
                pl.BlockSpec((1, H2), lambda i: (0, 0)),
                pl.BlockSpec((H2, N_pad), lambda i: (0, 0)),
                pl.BlockSpec((1, N_pad), lambda i: (0, 0)),
            ],
            out_specs=pl.BlockSpec((TM, N_pad), lambda i: (i, 0)),
            scratch_shapes=[pltpu.VMEM((TM, K_pad), jnp.bfloat16)],
        ),
        compiler_params=pltpu.CompilerParams(
            dimension_semantics=("parallel",),
        ),
    )(x_flat, w1_p, b1_f, w2_b, b2_f, w3_p, b3_p)

    return out[:B, :N_out].astype(jnp.float32)


def init_params(key):
    """PyTorch-Linear-style uniform init. Weights stored (in, out); biases (1, out)."""
    dims = [(28 * 28, 512), (512, 512), (512, 10)]
    params = []
    for i, (fan_in, fan_out) in enumerate(dims):
        kw, kb = jax.random.split(jax.random.fold_in(key, i))
        bound = 1.0 / (fan_in ** 0.5)
        w = jax.random.uniform(kw, (fan_in, fan_out), jnp.float32, -bound, bound)
        b = jax.random.uniform(kb, (1, fan_out), jnp.float32, -bound, bound)
        params += [w, b]
    return tuple(params)


def reference_forward(x_nchw, params):
    w1, b1, w2, b2, w3, b3 = params
    x = x_nchw.reshape(x_nchw.shape[0], -1)
    h = jnp.maximum(x @ w1 + b1, 0.0)
    h = jnp.maximum(h @ w2 + b2, 0.0)
    return jnp.maximum(h @ w3 + b3, 0.0)


# TODO(synk): train_loop / test_loop (optimizer, loss, data loading) are
# training-harness code, not part of the forward pass; not implemented here.

if __name__ == "__main__":
    key = jax.random.PRNGKey(0)
    params = init_params(key)

    # Small MNIST-like batch: (batch=8, channels=1, 28, 28)
    x = jax.random.normal(jax.random.fold_in(key, 99), (8, 1, 28, 28), jnp.float32)

    out = neural_network_forward(x, params)
    out = jax.block_until_ready(out)

    ref = reference_forward(x, params)
    assert out.shape == (8, 10)
    # bf16 weights/activations/output in the kernel vs. f32 reference.
    assert jnp.allclose(out, ref, atol=5e-2, rtol=5e-2), float(
        jnp.max(jnp.abs(out - ref)))

    print("KERNEL_OK")
</pallas_src>

<mosaic_0001>
module attributes {stable_mosaic.version = 11 : i64} {
  func.func @mlp_kernel(%arg0: i32, %arg1: memref<16x784xf32, #tpu.memory_space<vmem>>, %arg2: memref<896x512xbf16, #tpu.memory_space<vmem>>, %arg3: memref<1x512xf32, #tpu.memory_space<vmem>>, %arg4: memref<512x512xbf16, #tpu.memory_space<vmem>>, %arg5: memref<1x512xf32, #tpu.memory_space<vmem>>, %arg6: memref<512x128xbf16, #tpu.memory_space<vmem>>, %arg7: memref<1x128xf32, #tpu.memory_space<vmem>>, %arg8: memref<16x128xbf16, #tpu.memory_space<vmem>>, %arg9: memref<16x896xbf16, #tpu.memory_space<vmem>>) attributes {dimension_semantics = [#tpu.dimension_semantics<parallel>], iteration_bounds = array<i64: 1>, scalar_prefetch = 0 : i64, scratch_operands = 1 : i64, tpu.core_type = #tpu.core_type<tc>, window_params = [{transform_indices = @transform_0, window_bounds = array<i64: 16, 784>}, {pipeline_mode = #tpu.pipeline_mode<synchronous>, transform_indices = @transform_1, window_bounds = array<i64: 896, 512>}, {pipeline_mode = #tpu.pipeline_mode<synchronous>, transform_indices = @transform_2, window_bounds = array<i64: 1, 512>}, {pipeline_mode = #tpu.pipeline_mode<synchronous>, transform_indices = @transform_3, window_bounds = array<i64: 512, 512>}, {pipeline_mode = #tpu.pipeline_mode<synchronous>, transform_indices = @transform_4, window_bounds = array<i64: 1, 512>}, {pipeline_mode = #tpu.pipeline_mode<synchronous>, transform_indices = @transform_5, window_bounds = array<i64: 512, 128>}, {pipeline_mode = #tpu.pipeline_mode<synchronous>, transform_indices = @transform_6, window_bounds = array<i64: 1, 128>}, {transform_indices = @transform_7, window_bounds = array<i64: 16, 128>}]} {
    %cst = arith.constant 0.000000e+00 : bf16
    %0 = vector.broadcast %cst : bf16 to vector<16x128xbf16>
    %c0 = arith.constant 0 : index
    %c768 = arith.constant 768 : index
    %1 = vector.load %arg9[%c0, %c768] : memref<16x896xbf16, #tpu.memory_space<vmem>>, vector<16x128xbf16>
    tpu.vector_store %arg9[%c0, %c768], %0 {strides = array<i32>} : memref<16x896xbf16, #tpu.memory_space<vmem>>, vector<16x128xbf16>,
    %c0_0 = arith.constant 0 : index
    %c0_1 = arith.constant 0 : index
    %2 = vector.load %arg1[%c0_0, %c0_1] : memref<16x784xf32, #tpu.memory_space<vmem>>, vector<16x784xf32>
    %3 = arith.truncf %2 : vector<16x784xf32> to vector<16x784xbf16>
    %c0_2 = arith.constant 0 : index
    %c0_3 = arith.constant 0 : index
    %4 = vector.load %arg9[%c0_2, %c0_3] : memref<16x896xbf16, #tpu.memory_space<vmem>>, vector<16x784xbf16>
    tpu.vector_store %arg9[%c0_2, %c0_3], %3 {strides = array<i32>} : memref<16x896xbf16, #tpu.memory_space<vmem>>, vector<16x784xbf16>,
    %c0_4 = arith.constant 0 : index
    %c0_5 = arith.constant 0 : index
    %5 = vector.load %arg9[%c0_4, %c0_5] : memref<16x896xbf16, #tpu.memory_space<vmem>>, vector<16x896xbf16>
    %c0_6 = arith.constant 0 : index
    %c0_7 = arith.constant 0 : index
    %6 = vector.load %arg2[%c0_6, %c0_7] : memref<896x512xbf16, #tpu.memory_space<vmem>>, vector<896x512xbf16>
    %cst_8 = arith.constant dense<0.000000e+00> : vector<16x512xf32>
    %7 = tpu.matmul %5, %6, %cst_8 {dimension_numbers = #tpu.dot_dimension_numbers<[1], [0], [0], [1], [0, 0, 1, 1], [], []>} : vector<16x896xbf16>, vector<896x512xbf16>, vector<16x512xf32> -> vector<16x512xf32>
    %c0_9 = arith.constant 0 : index
    %c0_10 = arith.constant 0 : index
    %8 = vector.load %arg3[%c0_9, %c0_10] : memref<1x512xf32, #tpu.memory_space<vmem>>, vector<1x512xf32>
    %9 = vector.broadcast %8 : vector<1x512xf32> to vector<16x512xf32>
    %10 = arith.addf %7, %9 : vector<16x512xf32>
    %cst_11 = arith.constant 0.000000e+00 : f32
    %11 = vector.broadcast %cst_11 : f32 to vector<16x512xf32>
    %12 = arith.maximumf %10, %11 : vector<16x512xf32>
    %13 = arith.truncf %12 : vector<16x512xf32> to vector<16x512xbf16>
    %c0_12 = arith.constant 0 : index
    %c0_13 = arith.constant 0 : index
    %14 = vector.load %arg4[%c0_12, %c0_13] : memref<512x512xbf16, #tpu.memory_space<vmem>>, vector<512x512xbf16>
    %cst_14 = arith.constant dense<0.000000e+00> : vector<16x512xf32>
    %15 = tpu.matmul %13, %14, %cst_14 {dimension_numbers = #tpu.dot_dimension_numbers<[1], [0], [0], [1], [0, 0, 1, 1], [], []>} : vector<16x512xbf16>, vector<512x512xbf16>, vector<16x512xf32> -> vector<16x512xf32>
    %c0_15 = arith.constant 0 : index
    %c0_16 = arith.constant 0 : index
    %16 = vector.load %arg5[%c0_15, %c0_16] : memref<1x512xf32, #tpu.memory_space<vmem>>, vector<1x512xf32>
    %17 = vector.broadcast %16 : vector<1x512xf32> to vector<16x512xf32>
    %18 = arith.addf %15, %17 : vector<16x512xf32>
    %cst_17 = arith.constant 0.000000e+00 : f32
    %19 = vector.broadcast %cst_17 : f32 to vector<16x512xf32>
    %20 = arith.maximumf %18, %19 : vector<16x512xf32>
    %21 = arith.truncf %20 : vector<16x512xf32> to vector<16x512xbf16>
    %c0_18 = arith.constant 0 : index
    %c0_19 = arith.constant 0 : index
    %22 = vector.load %arg6[%c0_18, %c0_19] : memref<512x128xbf16, #tpu.memory_space<vmem>>, vector<512x128xbf16>
    %cst_20 = arith.constant dense<0.000000e+00> : vector<16x128xf32>
    %23 = tpu.matmul %21, %22, %cst_20 {dimension_numbers = #tpu.dot_dimension_numbers<[1], [0], [0], [1], [0, 0, 1, 1], [], []>} : vector<16x512xbf16>, vector<512x128xbf16>, vector<16x128xf32> -> vector<16x128xf32>
    %c0_21 = arith.constant 0 : index
    %c0_22 = arith.constant 0 : index
    %24 = vector.load %arg7[%c0_21, %c0_22] : memref<1x128xf32, #tpu.memory_space<vmem>>, vector<1x128xf32>
    %25 = vector.broadcast %24 : vector<1x128xf32> to vector<16x128xf32>
    %26 = arith.addf %23, %25 : vector<16x128xf32>
    %cst_23 = arith.constant 0.000000e+00 : f32
    %27 = vector.broadcast %cst_23 : f32 to vector<16x128xf32>
    %28 = arith.maximumf %26, %27 : vector<16x128xf32>
    %29 = arith.truncf %28 : vector<16x128xf32> to vector<16x128xbf16>
    %c0_24 = arith.constant 0 : index
    %c0_25 = arith.constant 0 : index
    %30 = vector.load %arg8[%c0_24, %c0_25] : memref<16x128xbf16, #tpu.memory_space<vmem>>, vector<16x128xbf16>
    tpu.vector_store %arg8[%c0_24, %c0_25], %29 {strides = array<i32>} : memref<16x128xbf16, #tpu.memory_space<vmem>>, vector<16x128xbf16>,
    return
  }
  func.func @transform_0(%arg0: i32) -> (i32, i32) {
    %c0_i32 = arith.constant 0 : i32
    %c0_i32_0 = arith.constant 0 : i32
    return %arg0, %c0_i32 : i32, i32
  }
  func.func @transform_1(%arg0: i32) -> (i32, i32) {
    %c0_i32 = arith.constant 0 : i32
    %c0_i32_0 = arith.constant 0 : i32
    %c0_i32_1 = arith.constant 0 : i32
    return %c0_i32, %c0_i32_0 : i32, i32
  }
  func.func @transform_2(%arg0: i32) -> (i32, i32) {
    %c0_i32 = arith.constant 0 : i32
    %c0_i32_0 = arith.constant 0 : i32
    %c0_i32_1 = arith.constant 0 : i32
    return %c0_i32, %c0_i32_0 : i32, i32
  }
  func.func @transform_3(%arg0: i32) -> (i32, i32) {
    %c0_i32 = arith.constant 0 : i32
    %c0_i32_0 = arith.constant 0 : i32
    %c0_i32_1 = arith.constant 0 : i32
    return %c0_i32, %c0_i32_0 : i32, i32
  }
  func.func @transform_4(%arg0: i32) -> (i32, i32) {
    %c0_i32 = arith.constant 0 : i32
    %c0_i32_0 = arith.constant 0 : i32
    %c0_i32_1 = arith.constant 0 : i32
    return %c0_i32, %c0_i32_0 : i32, i32
  }
  func.func @transform_5(%arg0: i32) -> (i32, i32) {
    %c0_i32 = arith.constant 0 : i32
    %c0_i32_0 = arith.constant 0 : i32
    %c0_i32_1 = arith.constant 0 : i32
    return %c0_i32, %c0_i32_0 : i32, i32
  }
  func.func @transform_6(%arg0: i32) -> (i32, i32) {
    %c0_i32 = arith.constant 0 : i32
    %c0_i32_0 = arith.constant 0 : i32
    %c0_i32_1 = arith.constant 0 : i32
    return %c0_i32, %c0_i32_0 : i32, i32
  }
  func.func @transform_7(%arg0: i32) -> (i32, i32) {
    %c0_i32 = arith.constant 0 : i32
    %c0_i32_0 = arith.constant 0 : i32
    return %arg0, %c0_i32 : i32, i32
  }
}

</mosaic_0001>

<llo_original>
// kernel: tpu_custom_call.1
$region0: #{tpu_custom_call.1}
  #allocation0 [shape = 'u32[]', space=smem, size = 0x4, offset = 0x4, fixed_abs, tag = 'smem constant byte address 0x4 - core index']
  #allocation1 [shape = 'u32[144,128]{1,0:T(1,128)}', space=vmem, size = 0x12000, scoped, tag = 'internal scratch']
  #allocation2 [shape = 'bf16[16,896]{1,0:T(16,128)(2,1)}', space=vmem, size = 0x7000, scoped, tag = 'scratch operand']
  %s0 = inlined_call_operand.hbm [shape: f32[16,784], index: 0, kind: input, shape index: {}]
  %s1 = inlined_call_operand.hbm [shape: bf16[896,512], index: 1, kind: input, shape index: {}]
  %s2 = inlined_call_operand.vmem [shape: f32[1,512], index: 2, kind: input, shape index: {}]
  %s3 = inlined_call_operand.hbm [shape: bf16[512,512], index: 3, kind: input, shape index: {}]
  %s4 = inlined_call_operand.vmem [shape: f32[1,512], index: 4, kind: input, shape index: {}]
  %s5 = inlined_call_operand.hbm [shape: bf16[512,128], index: 5, kind: input, shape index: {}]
  %s6 = inlined_call_operand.vmem [shape: f32[1,128], index: 6, kind: input, shape index: {}]
  %s7 = inlined_call_operand.hbm [shape: bf16[16,128], index: 7, kind: output, shape index: {}]
  %s8 = sld [smem:[#allocation0]]
  $region54: #{tpu_custom_call.1} parent=0
    _
  %s10 = ssub.s32 1, %s8
  %s11 = scalar_select 0, %s10, %s8
  $region1: #{tpu_custom_call.1} parent=0
    #allocation3 [shape = 'u8[57344]{0}', space=vmem, size = 0xe000, scoped, tag = 'input window, operand 0, single buffered']
    #allocation4 [shape = 's32[1]{0}', space=sflag, size = 0x4, scoped, tag = 'scoped memory for tpu_custom_call.1']
    #allocation5 [shape = 's32[1]{0}', space=sflag, size = 0x4, scoped, tag = 'scoped memory for tpu_custom_call.1']
    #allocation6 [shape = 'u8[917504]{0}', space=vmem, size = 0xe0000, scoped, tag = 'input window, operand 1, single buffered']
    #allocation7 [shape = 's32[1]{0}', space=sflag, size = 0x4, scoped, tag = 'scoped memory for tpu_custom_call.1']
    #allocation8 [shape = 'u8[524288]{0}', space=vmem, size = 0x80000, scoped, tag = 'input window, operand 3, single buffered']
    #allocation9 [shape = 'u8[131072]{0}', space=vmem, size = 0x20000, scoped, tag = 'input window, operand 5, single buffered']
    #allocation10 [shape = 's32[1]{0}', space=sflag, size = 0x4, scoped, tag = 'scoped memory for tpu_custom_call.1']
    #allocation11 [shape = 'u8[4096]{0}', space=vmem, size = 0x1000, scoped, tag = 'output window, operand 0, single buffered']
    %12 = vsyncpa [#allocation4], 0
    %13 = vsyncpa [#allocation7], 0
    %14 = vsyncpa [#allocation10], 0
    %15 = vsyncpa [#allocation5], 0
    // Predicated region
    $region2: #{tpu_custom_call.1} parent=1 // pred_check
      _
    $region3: #{tpu_custom_call.1} parent=1 // pred_check_branch
      %17 = sbr.rel (0) target = $region5
    $region4: #{tpu_custom_call.1} parent=1 // pred_region
      %s19 = ssub.s32 1792, 1792
      %20 = vsyncadd [#allocation4], %s19
      %s21 = sshll.u32 [#allocation3], 4
      %s22 = int_to_ptr.vmem [resolvable:$true] %s21
      %27 = dma.hbm_to_vmem [thread:$0]  %s0, 1792, %s22, [#allocation4], 896, 896, 56
    $region5: #{tpu_custom_call.1} parent=1 // pred_fallthru
      _
    // Predicated region
    $region6: #{tpu_custom_call.1} parent=1 // pred_check
      _
    $region7: #{tpu_custom_call.1} parent=1 // pred_check_branch
      %29 = sbr.rel (0) target = $region9
    $region8: #{tpu_custom_call.1} parent=1 // pred_region
      %s31 = ssub.s32 28672, 28672
      %32 = vsyncadd [#allocation7], %s31
      %s33 = sshll.u32 [#allocation6], 4
      %s34 = int_to_ptr.vmem [resolvable:$true] %s33
      %39 = dma.hbm_to_vmem [thread:$0]  %s1, 28672, %s34, [#allocation7], 256, 256, 16
    $region9: #{tpu_custom_call.1} parent=1 // pred_fallthru
      _
    // Predicated region
    $region10: #{tpu_custom_call.1} parent=1 // pred_check
      _
    $region11: #{tpu_custom_call.1} parent=1 // pred_check_branch
      %41 = sbr.rel (0) target = $region13
    $region12: #{tpu_custom_call.1} parent=1 // pred_region
      _
    $region13: #{tpu_custom_call.1} parent=1 // pred_fallthru
      _
    // Predicated region
    $region14: #{tpu_custom_call.1} parent=1 // pred_check
      _
    $region15: #{tpu_custom_call.1} parent=1 // pred_check_branch
      %43 = sbr.rel (0) target = $region17
    $region16: #{tpu_custom_call.1} parent=1 // pred_region
      %s45 = ssub.s32 16384, 16384
      %46 = vsyncadd [#allocation7], %s45
      %s47 = sshll.u32 [#allocation8], 4
      %s48 = int_to_ptr.vmem [resolvable:$true] %s47
      %53 = dma.hbm_to_vmem [thread:$0]  %s3, 16384, %s48, [#allocation7], 256, 256, 16
    $region17: #{tpu_custom_call.1} parent=1 // pred_fallthru
      _
    // Predicated region
    $region18: #{tpu_custom_call.1} parent=1 // pred_check
      _
    $region19: #{tpu_custom_call.1} parent=1 // pred_check_branch
      %55 = sbr.rel (0) target = $region21
    $region20: #{tpu_custom_call.1} parent=1 // pred_region
      _
    $region21: #{tpu_custom_call.1} parent=1 // pred_fallthru
      _
    // Predicated region
    $region22: #{tpu_custom_call.1} parent=1 // pred_check
      _
    $region23: #{tpu_custom_call.1} parent=1 // pred_check_branch
      %57 = sbr.rel (0) target = $region25
    $region24: #{tpu_custom_call.1} parent=1 // pred_region
      %s59 = ssub.s32 4096, 4096
      %60 = vsyncadd [#allocation10], %s59
      %s61 = sshll.u32 [#allocation9], 4
      %s62 = int_to_ptr.vmem [resolvable:$true] %s61
      %67 = dma.hbm_to_vmem [thread:$0]  %s5, 4096, %s62, [#allocation10], 64, 64, 4
    $region25: #{tpu_custom_call.1} parent=1 // pred_fallthru
      _
    // Predicated region
    $region26: #{tpu_custom_call.1} parent=1 // pred_check
      _
    $region27: #{tpu_custom_call.1} parent=1 // pred_check_branch
      %69 = sbr.rel (0) target = $region29
    $region28: #{tpu_custom_call.1} parent=1 // pred_region
      _
    $region29: #{tpu_custom_call.1} parent=1 // pred_fallthru
      _
    // Predicated region
    $region30: #{tpu_custom_call.1} parent=1 // pred_check
      _
    $region31: #{tpu_custom_call.1} parent=1 // pred_check_branch
      %71 = sbr.rel (0) target = $region33
    $region32: #{tpu_custom_call.1} parent=1 // pred_region
      %72 = dma.done [#allocation4], 1792
    $region33: #{tpu_custom_call.1} parent=1 // pred_fallthru
      _
    // Predicated region
    $region34: #{tpu_custom_call.1} parent=1 // pred_check
      _
    $region35: #{tpu_custom_call.1} parent=1 // pred_check_branch
      %74 = sbr.rel (0) target = $region37
    $region36: #{tpu_custom_call.1} parent=1 // pred_region
      %75 = dma.done [#allocation7], 28672
    $region37: #{tpu_custom_call.1} parent=1 // pred_fallthru
      _
    // Predicated region
    $region38: #{tpu_custom_call.1} parent=1 // pred_check
      _
    $region39: #{tpu_custom_call.1} parent=1 // pred_check_branch
      %77 = sbr.rel (0) target = $region41
    $region40: #{tpu_custom_call.1} parent=1 // pred_region
      %78 = dma.done [#allocation7], 16384
    $region41: #{tpu_custom_call.1} parent=1 // pred_fallthru
      _
    // Predicated region
    $region42: #{tpu_custom_call.1} parent=1 // pred_check
      _
    $region43: #{tpu_custom_call.1} parent=1 // pred_check_branch
      %80 = sbr.rel (0) target = $region45
    $region44: #{tpu_custom_call.1} parent=1 // pred_region
      %81 = dma.done [#allocation10], 4096
    $region45: #{tpu_custom_call.1} parent=1 // pred_fallthru
      _
    %83 = vst [vmem:[#allocation2 + $0x30] sm:$0xff] 0
    %v84 = vld [vmem:[#allocation3] sm:$0xff]
    %v85 = vld [vmem:[#allocation3 + $0x8] sm:$0xff]
    %v86 = vld [vmem:[#allocation3 + $0x10] sm:$0xff]
    %v87 = vld [vmem:[#allocation3 + $0x18] sm:$0xff]
    %v88 = vld [vmem:[#allocation3 + $0x20] sm:$0xff]
    %v89 = vld [vmem:[#allocation3 + $0x28] sm:$0xff]
    %v90 = vld [vmem:[#allocation3 + $0x30] sm:$0xff]
    %v91 = vld [vmem:[#allocation3 + $0x38] sm:$0xff]
    %v92 = vld [vmem:[#allocation3 + $0x40] sm:$0xff]
    %v93 = vld [vmem:[#allocation3 + $0x48] sm:$0xff]
    %v94 = vld [vmem:[#allocation3 + $0x50] sm:$0xff]
    %v95 = vld [vmem:[#allocation3 + $0x58] sm:$0xff]
    %v96 = vld [vmem:[#allocation3 + $0x60] sm:$0xff]
    %v97 = vld [vmem:[#allocation3 + $0x68] sm:$0xff]
    %v98 = vpack.c.bf16 %v91, %v84
    %v99 = vpack.c.bf16 %v92, %v85
    %v100 = vpack.c.bf16 %v93, %v86
    %v101 = vpack.c.bf16 %v94, %v87
    %v102 = vpack.c.bf16 %v95, %v88
    %v103 = vpack.c.bf16 %v96, %v89
    %v104 = vpack.c.bf16 %v97, %v90
    %105 = vst [vmem:[#allocation2] sm:$0xff] %v98
    %106 = vst [vmem:[#allocation2 + $0x8] sm:$0xff] %v99
    %107 = vst [vmem:[#allocation2 + $0x10] sm:$0xff] %v100
    %108 = vst [vmem:[#allocation2 + $0x18] sm:$0xff] %v101
    %109 = vst [vmem:[#allocation2 + $0x20] sm:$0xff] %v102
    %110 = vst [vmem:[#allocation2 + $0x28] sm:$0xff] %v103
    %vm111 = vcmask 130048
    %112 = vst.msk [vmem:[#allocation2 + $0x30] sm:$0xff] %vm111, %v104
    %v113 = vld [vmem:[#allocation2] sm:$0xff]
    %v114 = vld [vmem:[#allocation2 + $0x8] sm:$0xff]
    %v115 = vld [vmem:[#allocation2 + $0x10] sm:$0xff]
    %v116 = vld [vmem:[#allocation2 + $0x18] sm:$0xff]
    %v117 = vld [vmem:[#allocation2 + $0x20] sm:$0xff]
    %v118 = vld [vmem:[#allocation2 + $0x28] sm:$0xff]
    %v119 = vld [vmem:[#allocation2 + $0x30] sm:$0xff]
    %v120 = vld [vmem:[#allocation6] sm:$0xff]
    %v121 = vld [vmem:[#allocation6 + $0x8] sm:$0xff]
    %v122 = vld [vmem:[#allocation6 + $0x10] sm:$0xff]
    %v123 = vld [vmem:[#allocation6 + $0x18] sm:$0xff]
    %v124 = vld [vmem:[#allocation6 + $0x20] sm:$0xff]
    %v125 = vld [vmem:[#allocation6 + $0x28] sm:$0xff]
    %v126 = vld [vmem:[#allocation6 + $0x30] sm:$0xff]
    %v127 = vld [vmem:[#allocation6 + $0x38] sm:$0xff]
    %v128 = vld [vmem:[#allocation6 + $0x40] sm:$0xff]
    %v129 = vld [vmem:[#allocation6 + $0x48] sm:$0xff]
    %v130 = vld [vmem:[#allocation6 + $0x50] sm:$0xff]
    %v131 = vld [vmem:[#allocation6 + $0x58] sm:$0xff]
    %v132 = vld [vmem:[#allocation6 + $0x60] sm:$0xff]
    %v133 = vld [vmem:[#allocation6 + $0x68] sm:$0xff]
    %v134 = vld [vmem:[#allocation6 + $0x70] sm:$0xff]
    %v135 = vld [vmem:[#allocation6 + $0x78] sm:$0xff]
    %v136 = vld [vmem:[#allocation6 + $0x80] sm:$0xff]
    %v137 = vld [vmem:[#allocation6 + $0x88] sm:$0xff]
    %v138 = vld [vmem:[#allocation6 + $0x90] sm:$0xff]
    %v139 = vld [vmem:[#allocation6 + $0x98] sm:$0xff]
    %v140 = vld [vmem:[#allocation6 + $0xa0] sm:$0xff]
    %v141 = vld [vmem:[#allocation6 + $0xa8] sm:$0xff]
    %v142 = vld [vmem:[#allocation6 + $0xb0] sm:$0xff]
    %v143 = vld [vmem:[#allocation6 + $0xb8] sm:$0xff]
    %v144 = vld [vmem:[#allocation6 + $0xc0] sm:$0xff]
    %v145 = vld [vmem:[#allocation6 + $0xc8] sm:$0xff]
    %v146 = vld [vmem:[#allocation6 + $0xd0] sm:$0xff]
    %v147 = vld [vmem:[#allocation6 + $0xd8] sm:$0xff]
    %v148 = vld [vmem:[#allocation6 + $0xe0] sm:$0xff]
    %v149 = vld [vmem:[#allocation6 + $0xe8] sm:$0xff]
    %v150 = vld [vmem:[#allocation6 + $0xf0] sm:$0xff]
    %v151 = vld [vmem:[#allocation6 + $0xf8] sm:$0xff]
    %v152 = vld [vmem:[#allocation6 + $0x100] sm:$0xff]
    %v153 = vld [vmem:[#allocation6 + $0x108] sm:$0xff]
    %v154 = vld [vmem:[#allocation6 + $0x110] sm:$0xff]
    %v155 = vld [vmem:[#allocation6 + $0x118] sm:$0xff]
    %v156 = vld [vmem:[#allocation6 + $0x120] sm:$0xff]
    %v157 = vld [vmem:[#allocation6 + $0x128] sm:$0xff]
    %v158 = vld [vmem:[#allocation6 + $0x130] sm:$0xff]
    %v159 = vld [vmem:[#allocation6 + $0x138] sm:$0xff]
    %v160 = vld [vmem:[#allocation6 + $0x140] sm:$0xff]
    %v161 = vld [vmem:[#allocation6 + $0x148] sm:$0xff]
    %v162 = vld [vmem:[#allocation6 + $0x150] sm:$0xff]
    %v163 = vld [vmem:[#allocation6 + $0x158] sm:$0xff]
    %v164 = vld [vmem:[#allocation6 + $0x160] sm:$0xff]
    %v165 = vld [vmem:[#allocation6 + $0x168] sm:$0xff]
    %v166 = vld [vmem:[#allocation6 + $0x170] sm:$0xff]
    %v167 = vld [vmem:[#allocation6 + $0x178] sm:$0xff]
    %v168 = vld [vmem:[#allocation6 + $0x180] sm:$0xff]
    %v169 = vld [vmem:[#allocation6 + $0x188] sm:$0xff]
    %v170 = vld [vmem:[#allocation6 + $0x190] sm:$0xff]
    %v171 = vld [vmem:[#allocation6 + $0x198] sm:$0xff]
    %v172 = vld [vmem:[#allocation6 + $0x1a0] sm:$0xff]
    %v173 = vld [vmem:[#allocation6 + $0x1a8] sm:$0xff]
    %v174 = vld [vmem:[#allocation6 + $0x1b0] sm:$0xff]
    %v175 = vld [vmem:[#allocation6 + $0x1b8] sm:$0xff]
    %v176 = vld [vmem:[#allocation6 + $0x1c0] sm:$0xff]
    %v177 = vld [vmem:[#allocation6 + $0x1c8] sm:$0xff]
    %v178 = vld [vmem:[#allocation6 + $0x1d0] sm:$0xff]
    %v179 = vld [vmem:[#allocation6 + $0x1d8] sm:$0xff]
    %v180 = vld [vmem:[#allocation6 + $0x1e0] sm:$0xff]
    %v181 = vld [vmem:[#allocation6 + $0x1e8] sm:$0xff]
    %v182 = vld [vmem:[#allocation6 + $0x1f0] sm:$0xff]
    %v183 = vld [vmem:[#allocation6 + $0x1f8] sm:$0xff]
    %v184 = vld [vmem:[#allocation6 + $0x200] sm:$0xff]
    %v185 = vld [vmem:[#allocation6 + $0x208] sm:$0xff]
    %v186 = vld [vmem:[#allocation6 + $0x210] sm:$0xff]
    %v187 = vld [vmem:[#allocation6 + $0x218] sm:$0xff]
    %v188 = vld [vmem:[#allocation6 + $0x220] sm:$0xff]
    %v189 = vld [vmem:[#allocation6 + $0x228] sm:$0xff]
    %v190 = vld [vmem:[#allocation6 + $0x230] sm:$0xff]
    %v191 = vld [vmem:[#allocation6 + $0x238] sm:$0xff]
    %v192 = vld [vmem:[#allocation6 + $0x240] sm:$0xff]
    %v193 = vld [vmem:[#allocation6 + $0x248] sm:$0xff]
    %v194 = vld [vmem:[#allocation6 + $0x250] sm:$0xff]
    %v195 = vld [vmem:[#allocation6 + $0x258] sm:$0xff]
    %v196 = vld [vmem:[#allocation6 + $0x260] sm:$0xff]
    %v197 = vld [vmem:[#allocation6 + $0x268] sm:$0xff]
    %v198 = vld [vmem:[#allocation6 + $0x270] sm:$0xff]
    %v199 = vld [vmem:[#allocation6 + $0x278] sm:$0xff]
    %v200 = vld [vmem:[#allocation6 + $0x280] sm:$0xff]
    %v201 = vld [vmem:[#allocation6 + $0x288] sm:$0xff]
    %v202 = vld [vmem:[#allocation6 + $0x290] sm:$0xff]
    %v203 = vld [vmem:[#allocation6 + $0x298] sm:$0xff]
    %v204 = vld [vmem:[#allocation6 + $0x2a0] sm:$0xff]
    %v205 = vld [vmem:[#allocation6 + $0x2a8] sm:$0xff]
    %v206 = vld [vmem:[#allocation6 + $0x2b0] sm:$0xff]
    %v207 = vld [vmem:[#allocation6 + $0x2b8] sm:$0xff]
    %v208 = vld [vmem:[#allocation6 + $0x2c0] sm:$0xff]
    %v209 = vld [vmem:[#allocation6 + $0x2c8] sm:$0xff]
    %v210 = vld [vmem:[#allocation6 + $0x2d0] sm:$0xff]
    %v211 = vld [vmem:[#allocation6 + $0x2d8] sm:$0xff]
    %v212 = vld [vmem:[#allocation6 + $0x2e0] sm:$0xff]
    %v213 = vld [vmem:[#allocation6 + $0x2e8] sm:$0xff]
    %v214 = vld [vmem:[#allocation6 + $0x2f0] sm:$0xff]
    %v215 = vld [vmem:[#allocation6 + $0x2f8] sm:$0xff]
    %v216 = vld [vmem:[#allocation6 + $0x300] sm:$0xff]
    %v217 = vld [vmem:[#allocation6 + $0x308] sm:$0xff]
    %v218 = vld [vmem:[#allocation6 + $0x310] sm:$0xff]
    %v219 = vld [vmem:[#allocation6 + $0x318] sm:$0xff]
    %v220 = vld [vmem:[#allocation6 + $0x320] sm:$0xff]
    %v221 = vld [vmem:[#allocation6 + $0x328] sm:$0xff]
    %v222 = vld [vmem:[#allocation6 + $0x330] sm:$0xff]
    %v223 = vld [vmem:[#allocation6 + $0x338] sm:$0xff]
    %v224 = vld [vmem:[#allocation6 + $0x340] sm:$0xff]
    %v225 = vld [vmem:[#allocation6 + $0x348] sm:$0xff]
    %v226 = vld [vmem:[#allocation6 + $0x350] sm:$0xff]
    %v227 = vld [vmem:[#allocation6 + $0x358] sm:$0xff]
    %v228 = vld [vmem:[#allocation6 + $0x360] sm:$0xff]
    %v229 = vld [vmem:[#allocation6 + $0x368] sm:$0xff]
    %v230 = vld [vmem:[#allocation6 + $0x370] sm:$0xff]
    %v231 = vld [vmem:[#allocation6 + $0x378] sm:$0xff]
    %v232 = vld [vmem:[#allocation6 + $0x380] sm:$0xff]
    %v233 = vld [vmem:[#allocation6 + $0x388] sm:$0xff]
    %v234 = vld [vmem:[#allocation6 + $0x390] sm:$0xff]
    %v235 = vld [vmem:[#allocation6 + $0x398] sm:$0xff]
    %v236 = vld [vmem:[#allocation6 + $0x3a0] sm:$0xff]
    %v237 = vld [vmem:[#allocation6 + $0x3a8] sm:$0xff]
    %v238 = vld [vmem:[#allocation6 + $0x3b0] sm:$0xff]
    %v239 = vld [vmem:[#allocation6 + $0x3b8] sm:$0xff]
    %v240 = vld [vmem:[#allocation6 + $0x3c0] sm:$0xff]
    %v241 = vld [vmem:[#allocation6 + $0x3c8] sm:$0xff]
    %v242 = vld [vmem:[#allocation6 + $0x3d0] sm:$0xff]
    %v243 = vld [vmem:[#allocation6 + $0x3d8] sm:$0xff]
    %v244 = vld [vmem:[#allocation6 + $0x3e0] sm:$0xff]
    %v245 = vld [vmem:[#allocation6 + $0x3e8] sm:$0xff]
    %v246 = vld [vmem:[#allocation6 + $0x3f0] sm:$0xff]
    %v247 = vld [vmem:[#allocation6 + $0x3f8] sm:$0xff]
    %v248 = vld [vmem:[#allocation6 + $0x400] sm:$0xff]
    %v249 = vld [vmem:[#allocation6 + $0x408] sm:$0xff]
    %v250 = vld [vmem:[#allocation6 + $0x410] sm:$0xff]
    %v251 = vld [vmem:[#allocation6 + $0x418] sm:$0xff]
    %v252 = vld [vmem:[#allocation6 + $0x420] sm:$0xff]
    %v253 = vld [vmem:[#allocation6 + $0x428] sm:$0xff]
    %v254 = vld [vmem:[#allocation6 + $0x430] sm:$0xff]
    %v255 = vld [vmem:[#allocation6 + $0x438] sm:$0xff]
    %v256 = vld [vmem:[#allocation6 + $0x440] sm:$0xff]
    %v257 = vld [vmem:[#allocation6 + $0x448] sm:$0xff]
    %v258 = vld [vmem:[#allocation6 + $0x450] sm:$0xff]
    %v259 = vld [vmem:[#allocation6 + $0x458] sm:$0xff]
    %v260 = vld [vmem:[#allocation6 + $0x460] sm:$0xff]
    %v261 = vld [vmem:[#allocation6 + $0x468] sm:$0xff]
    %v262 = vld [vmem:[#allocation6 + $0x470] sm:$0xff]
    %v263 = vld [vmem:[#allocation6 + $0x478] sm:$0xff]
    %v264 = vld [vmem:[#allocation6 + $0x480] sm:$0xff]
    %v265 = vld [vmem:[#allocation6 + $0x488] sm:$0xff]
    %v266 = vld [vmem:[#allocation6 + $0x490] sm:$0xff]
    %v267 = vld [vmem:[#allocation6 + $0x498] sm:$0xff]
    %v268 = vld [vmem:[#allocation6 + $0x4a0] sm:$0xff]
    %v269 = vld [vmem:[#allocation6 + $0x4a8] sm:$0xff]
    %v270 = vld [vmem:[#allocation6 + $0x4b0] sm:$0xff]
    %v271 = vld [vmem:[#allocation6 + $0x4b8] sm:$0xff]
    %v272 = vld [vmem:[#allocation6 + $0x4c0] sm:$0xff]
    %v273 = vld [vmem:[#allocation6 + $0x4c8] sm:$0xff]
    %v274 = vld [vmem:[#allocation6 + $0x4d0] sm:$0xff]
    %v275 = vld [vmem:[#allocation6 + $0x4d8] sm:$0xff]
    %v276 = vld [vmem:[#allocation6 + $0x4e0] sm:$0xff]
    %v277 = vld [vmem:[#allocation6 + $0x4e8] sm:$0xff]
    %v278 = vld [vmem:[#allocation6 + $0x4f0] sm:$0xff]
    %v279 = vld [vmem:[#allocation6 + $0x4f8] sm:$0xff]
    %v280 = vld [vmem:[#allocation6 + $0x500] sm:$0xff]
    %v281 = vld [vmem:[#allocation6 + $0x508] sm:$0xff]
    %v282 = vld [vmem:[#allocation6 + $0x510] sm:$0xff]
    %v283 = vld [vmem:[#allocation6 + $0x518] sm:$0xff]
    %v284 = vld [vmem:[#allocation6 + $0x520] sm:$0xff]
    %v285 = vld [vmem:[#allocation6 + $0x528] sm:$0xff]
    %v286 = vld [vmem:[#allocation6 + $0x530] sm:$0xff]
    %v287 = vld [vmem:[#allocation6 + $0x538] sm:$0xff]
    %v288 = vld [vmem:[#allocation6 + $0x540] sm:$0xff]
    %v289 = vld [vmem:[#allocation6 + $0x548] sm:$0xff]
    %v290 = vld [vmem:[#allocation6 + $0x550] sm:$0xff]
    %v291 = vld [vmem:[#allocation6 + $0x558] sm:$0xff]
    %v292 = vld [vmem:[#allocation6 + $0x560] sm:$0xff]
    %v293 = vld [vmem:[#allocation6 + $0x568] sm:$0xff]
    %v294 = vld [vmem:[#allocation6 + $0x570] sm:$0xff]
    %v295 = vld [vmem:[#allocation6 + $0x578] sm:$0xff]
    %v296 = vld [vmem:[#allocation6 + $0x580] sm:$0xff]
    %v297 = vld [vmem:[#allocation6 + $0x588] sm:$0xff]
    %v298 = vld [vmem:[#allocation6 + $0x590] sm:$0xff]
    %v299 = vld [vmem:[#allocation6 + $0x598] sm:$0xff]
    %v300 = vld [vmem:[#allocation6 + $0x5a0] sm:$0xff]
    %v301 = vld [vmem:[#allocation6 + $0x5a8] sm:$0xff]
    %v302 = vld [vmem:[#allocation6 + $0x5b0] sm:$0xff]
    %v303 = vld [vmem:[#allocation6 + $0x5b8] sm:$0xff]
    %v304 = vld [vmem:[#allocation6 + $0x5c0] sm:$0xff]
    %v305 = vld [vmem:[#allocation6 + $0x5c8] sm:$0xff]
    %v306 = vld [vmem:[#allocation6 + $0x5d0] sm:$0xff]
    %v307 = vld [vmem:[#allocation6 + $0x5d8] sm:$0xff]
    %v308 = vld [vmem:[#allocation6 + $0x5e0] sm:$0xff]
    %v309 = vld [vmem:[#allocation6 + $0x5e8] sm:$0xff]
    %v310 = vld [vmem:[#allocation6 + $0x5f0] sm:$0xff]
    %v311 = vld [vmem:[#allocation6 + $0x5f8] sm:$0xff]
    %v312 = vld [vmem:[#allocation6 + $0x600] sm:$0xff]
    %v313 = vld [vmem:[#allocation6 + $0x608] sm:$0xff]
    %v314 = vld [vmem:[#allocation6 + $0x610] sm:$0xff]
    %v315 = vld [vmem:[#allocation6 + $0x618] sm:$0xff]
    %v316 = vld [vmem:[#allocation6 + $0x620] sm:$0xff]
    %v317 = vld [vmem:[#allocation6 + $0x628] sm:$0xff]
    %v318 = vld [vmem:[#allocation6 + $0x630] sm:$0xff]
    %v319 = vld [vmem:[#allocation6 + $0x638] sm:$0xff]
    %v320 = vld [vmem:[#allocation6 + $0x640] sm:$0xff]
    %v321 = vld [vmem:[#allocation6 + $0x648] sm:$0xff]
    %v322 = vld [vmem:[#allocation6 + $0x650] sm:$0xff]
    %v323 = vld [vmem:[#allocation6 + $0x658] sm:$0xff]
    %v324 = vld [vmem:[#allocation6 + $0x660] sm:$0xff]
    %v325 = vld [vmem:[#allocation6 + $0x668] sm:$0xff]
    %v326 = vld [vmem:[#allocation6 + $0x670] sm:$0xff]
    %v327 = vld [vmem:[#allocation6 + $0x678] sm:$0xff]
    %v328 = vld [vmem:[#allocation6 + $0x680] sm:$0xff]
    %v329 = vld [vmem:[#allocation6 + $0x688] sm:$0xff]
    %v330 = vld [vmem:[#allocation6 + $0x690] sm:$0xff]
    %v331 = vld [vmem:[#allocation6 + $0x698] sm:$0xff]
    %v332 = vld [vmem:[#allocation6 + $0x6a0] sm:$0xff]
    %v333 = vld [vmem:[#allocation6 + $0x6a8] sm:$0xff]
    %v334 = vld [vmem:[#allocation6 + $0x6b0] sm:$0xff]
    %v335 = vld [vmem:[#allocation6 + $0x6b8] sm:$0xff]
    %v336 = vld [vmem:[#allocation6 + $0x6c0] sm:$0xff]
    %v337 = vld [vmem:[#allocation6 + $0x6c8] sm:$0xff]
    %v338 = vld [vmem:[#allocation6 + $0x6d0] sm:$0xff]
    %v339 = vld [vmem:[#allocation6 + $0x6d8] sm:$0xff]
    %v340 = vld [vmem:[#allocation6 + $0x6e0] sm:$0xff]
    %v341 = vld [vmem:[#allocation6 + $0x6e8] sm:$0xff]
    %v342 = vld [vmem:[#allocation6 + $0x6f0] sm:$0xff]
    %v343 = vld [vmem:[#allocation6 + $0x6f8] sm:$0xff]
    %v344 = vld [vmem:[%s2] sm:$0xf]
    %v346 = vlaneseq
    %v347 = vshrl.u32 %v346, 7
    %v348 = vsub.s32 0, %v347
    %v349 = vrot.slane %v344, %v348
    %v350 = vlaneseq
    %v351 = vshrl.u32 %v350, 7
    %v352 = vsub.s32 1, %v351
    %v353 = vrot.slane %v344, %v352
    %v354 = vlaneseq
    %v355 = vshrl.u32 %v354, 7
    %v356 = vsub.s32 2, %v355
    %v357 = vrot.slane %v344, %v356
    %v358 = vlaneseq
    %v359 = vshrl.u32 %v358, 7
    %v360 = vsub.s32 3, %v359
    %v361 = vrot.slane %v344, %v360
    %v590 = vunpack.c.l.b16 %v120
    %v591 = vunpack.c.h.b16 %v120
    %v592 = vunpack.c.l.b16 %v121
    %v593 = vunpack.c.h.b16 %v121
    %v594 = vunpack.c.l.b16 %v122
    %v595 = vunpack.c.h.b16 %v122
    %v596 = vunpack.c.l.b16 %v123
    %v597 = vunpack.c.h.b16 %v123
    %v598 = vunpack.c.l.b16 %v124
    %v599 = vunpack.c.h.b16 %v124
    %v600 = vunpack.c.l.b16 %v125
    %v601 = vunpack.c.h.b16 %v125
    %v602 = vunpack.c.l.b16 %v126
    %v603 = vunpack.c.h.b16 %v126
    %v604 = vunpack.c.l.b16 %v127
    %v605 = vunpack.c.h.b16 %v127
    %v606 = vunpack.c.l.b16 %v128
    %v607 = vunpack.c.h.b16 %v128
    %v608 = vunpack.c.l.b16 %v129
    %v609 = vunpack.c.h.b16 %v129
    %v610 = vunpack.c.l.b16 %v130
    %v611 = vunpack.c.h.b16 %v130
    %v612 = vunpack.c.l.b16 %v131
    %v613 = vunpack.c.h.b16 %v131
    %v614 = vunpack.c.l.b16 %v132
    %v615 = vunpack.c.h.b16 %v132
    %v616 = vunpack.c.l.b16 %v133
    %v617 = vunpack.c.h.b16 %v133
    %v618 = vunpack.c.l.b16 %v134
    %v619 = vunpack.c.h.b16 %v134
    %v620 = vunpack.c.l.b16 %v135
    %v621 = vunpack.c.h.b16 %v135
    %v622 = vunpack.c.l.b16 %v136
    %v623 = vunpack.c.h.b16 %v136
    %v624 = vunpack.c.l.b16 %v137
    %v625 = vunpack.c.h.b16 %v137
    %v626 = vunpack.c.l.b16 %v138
    %v627 = vunpack.c.h.b16 %v138
    %v628 = vunpack.c.l.b16 %v139
    %v629 = vunpack.c.h.b16 %v139
    %v630 = vunpack.c.l.b16 %v140
    %v631 = vunpack.c.h.b16 %v140
    %v632 = vunpack.c.l.b16 %v141
    %v633 = vunpack.c.h.b16 %v141
    %v634 = vunpack.c.l.b16 %v142
    %v635 = vunpack.c.h.b16 %v142
    %v636 = vunpack.c.l.b16 %v143
    %v637 = vunpack.c.h.b16 %v143
    %v638 = vunpack.c.l.b16 %v144
    %v639 = vunpack.c.h.b16 %v144
    %v640 = vunpack.c.l.b16 %v145
    %v641 = vunpack.c.h.b16 %v145
    %v642 = vunpack.c.l.b16 %v146
    %v643 = vunpack.c.h.b16 %v146
    %v644 = vunpack.c.l.b16 %v147
    %v645 = vunpack.c.h.b16 %v147
    %v646 = vunpack.c.l.b16 %v148
    %v647 = vunpack.c.h.b16 %v148
    %v648 = vunpack.c.l.b16 %v149
    %v649 = vunpack.c.h.b16 %v149
    %v650 = vunpack.c.l.b16 %v150
    %v651 = vunpack.c.h.b16 %v150
    %v652 = vunpack.c.l.b16 %v151
    %v653 = vunpack.c.h.b16 %v151
    %v654 = vunpack.c.l.b16 %v152
    %v655 = vunpack.c.h.b16 %v152
    %v656 = vunpack.c.l.b16 %v153
    %v657 = vunpack.c.h.b16 %v153
    %v658 = vunpack.c.l.b16 %v154
    %v659 = vunpack.c.h.b16 %v154
    %v660 = vunpack.c.l.b16 %v155
    %v661 = vunpack.c.h.b16 %v155
    %v662 = vunpack.c.l.b16 %v156
    %v663 = vunpack.c.h.b16 %v156
    %v664 = vunpack.c.l.b16 %v157
    %v665 = vunpack.c.h.b16 %v157
    %v666 = vunpack.c.l.b16 %v158
    %v667 = vunpack.c.h.b16 %v158
    %v668 = vunpack.c.l.b16 %v159
    %v669 = vunpack.c.h.b16 %v159
    %v670 = vunpack.c.l.b16 %v160
    %v671 = vunpack.c.h.b16 %v160
    %v672 = vunpack.c.l.b16 %v161
    %v673 = vunpack.c.h.b16 %v161
    %v674 = vunpack.c.l.b16 %v162
    %v675 = vunpack.c.h.b16 %v162
    %v676 = vunpack.c.l.b16 %v163
    %v677 = vunpack.c.h.b16 %v163
    %v678 = vunpack.c.l.b16 %v164
    %v679 = vunpack.c.h.b16 %v164
    %v680 = vunpack.c.l.b16 %v165
    %v681 = vunpack.c.h.b16 %v165
    %v682 = vunpack.c.l.b16 %v166
    %v683 = vunpack.c.h.b16 %v166
    %v684 = vunpack.c.l.b16 %v167
    %v685 = vunpack.c.h.b16 %v167
    %v686 = vunpack.c.l.b16 %v168
    %v687 = vunpack.c.h.b16 %v168
    %v688 = vunpack.c.l.b16 %v169
    %v689 = vunpack.c.h.b16 %v169
    %v690 = vunpack.c.l.b16 %v170
    %v691 = vunpack.c.h.b16 %v170
    %v692 = vunpack.c.l.b16 %v171
    %v693 = vunpack.c.h.b16 %v171
    %v694 = vunpack.c.l.b16 %v172
    %v695 = vunpack.c.h.b16 %v172
    %v696 = vunpack.c.l.b16 %v173
    %v697 = vunpack.c.h.b16 %v173
    %v698 = vunpack.c.l.b16 %v174
    %v699 = vunpack.c.h.b16 %v174
    %v700 = vunpack.c.l.b16 %v175
    %v701 = vunpack.c.h.b16 %v175
    %v702 = vunpack.c.l.b16 %v176
    %v703 = vunpack.c.h.b16 %v176
    %v704 = vunpack.c.l.b16 %v177
    %v705 = vunpack.c.h.b16 %v177
    %v706 = vunpack.c.l.b16 %v178
    %v707 = vunpack.c.h.b16 %v178
    %v708 = vunpack.c.l.b16 %v179
    %v709 = vunpack.c.h.b16 %v179
    %v710 = vunpack.c.l.b16 %v180
    %v711 = vunpack.c.h.b16 %v180
    %v712 = vunpack.c.l.b16 %v181
    %v713 = vunpack.c.h.b16 %v181
    %v714 = vunpack.c.l.b16 %v182
    %v715 = vunpack.c.h.b16 %v182
    %v716 = vunpack.c.l.b16 %v183
    %v717 = vunpack.c.h.b16 %v183
    %v718 = vunpack.c.l.b16 %v184
    %v719 = vunpack.c.h.b16 %v184
    %v720 = vunpack.c.l.b16 %v185
    %v721 = vunpack.c.h.b16 %v185
    %v722 = vunpack.c.l.b16 %v186
    %v723 = vunpack.c.h.b16 %v186
    %v724 = vunpack.c.l.b16 %v187
    %v725 = vunpack.c.h.b16 %v187
    %v726 = vunpack.c.l.b16 %v188
    %v727 = vunpack.c.h.b16 %v188
    %v728 = vunpack.c.l.b16 %v189
    %v729 = vunpack.c.h.b16 %v189
    %v730 = vunpack.c.l.b16 %v190
    %v731 = vunpack.c.h.b16 %v190
    %v732 = vunpack.c.l.b16 %v191
    %v733 = vunpack.c.h.b16 %v191
    %v734 = vunpack.c.l.b16 %v192
    %v735 = vunpack.c.h.b16 %v192
    %v736 = vunpack.c.l.b16 %v193
    %v737 = vunpack.c.h.b16 %v193
    %v738 = vunpack.c.l.b16 %v194
    %v739 = vunpack.c.h.b16 %v194
    %v740 = vunpack.c.l.b16 %v195
    %v741 = vunpack.c.h.b16 %v195
    %v742 = vunpack.c.l.b16 %v196
    %v743 = vunpack.c.h.b16 %v196
    %v744 = vunpack.c.l.b16 %v197
    %v745 = vunpack.c.h.b16 %v197
    %v746 = vunpack.c.l.b16 %v198
    %v747 = vunpack.c.h.b16 %v198
    %v748 = vunpack.c.l.b16 %v199
    %v749 = vunpack.c.h.b16 %v199
    %v750 = vunpack.c.l.b16 %v200
    %v751 = vunpack.c.h.b16 %v200
    %v752 = vunpack.c.l.b16 %v201
    %v753 = vunpack.c.h.b16 %v201
    %v754 = vunpack.c.l.b16 %v202
    %v755 = vunpack.c.h.b16 %v202
    %v756 = vunpack.c.l.b16 %v203
    %v757 = vunpack.c.h.b16 %v203
    %v758 = vunpack.c.l.b16 %v204
    %v759 = vunpack.c.h.b16 %v204
    %v760 = vunpack.c.l.b16 %v205
    %v761 = vunpack.c.h.b16 %v205
    %v762 = vunpack.c.l.b16 %v206
    %v763 = vunpack.c.h.b16 %v206
    %v764 = vunpack.c.l.b16 %v207
    %v765 = vunpack.c.h.b16 %v207
    %v766 = vunpack.c.l.b16 %v208
    %v767 = vunpack.c.h.b16 %v208
    %v768 = vunpack.c.l.b16 %v209
    %v769 = vunpack.c.h.b16 %v209
    %v770 = vunpack.c.l.b16 %v210
    %v771 = vunpack.c.h.b16 %v210
    %v772 = vunpack.c.l.b16 %v211
    %v773 = vunpack.c.h.b16 %v211
    %v774 = vunpack.c.l.b16 %v212
    %v775 = vunpack.c.h.b16 %v212
    %v776 = vunpack.c.l.b16 %v213
    %v777 = vunpack.c.h.b16 %v213
    %v778 = vunpack.c.l.b16 %v214
    %v779 = vunpack.c.h.b16 %v214
    %v780 = vunpack.c.l.b16 %v215
    %v781 = vunpack.c.h.b16 %v215
    %v782 = vunpack.c.l.b16 %v216
    %v783 = vunpack.c.h.b16 %v216
    %v784 = vunpack.c.l.b16 %v217
    %v785 = vunpack.c.h.b16 %v217
    %v786 = vunpack.c.l.b16 %v218
    %v787 = vunpack.c.h.b16 %v218
    %v788 = vunpack.c.l.b16 %v219
    %v789 = vunpack.c.h.b16 %v219
    %v790 = vunpack.c.l.b16 %v220
    %v791 = vunpack.c.h.b16 %v220
    %v792 = vunpack.c.l.b16 %v221
    %v793 = vunpack.c.h.b16 %v221
    %v794 = vunpack.c.l.b16 %v222
    %v795 = vunpack.c.h.b16 %v222
    %v796 = vunpack.c.l.b16 %v223
    %v797 = vunpack.c.h.b16 %v223
    %v798 = vunpack.c.l.b16 %v224
    %v799 = vunpack.c.h.b16 %v224
    %v800 = vunpack.c.l.b16 %v225
    %v801 = vunpack.c.h.b16 %v225
    %v802 = vunpack.c.l.b16 %v226
    %v803 = vunpack.c.h.b16 %v226
    %v804 = vunpack.c.l.b16 %v227
    %v805 = vunpack.c.h.b16 %v227
    %v806 = vunpack.c.l.b16 %v228
    %v807 = vunpack.c.h.b16 %v228
    %v808 = vunpack.c.l.b16 %v229
    %v809 = vunpack.c.h.b16 %v229
    %v810 = vunpack.c.l.b16 %v230
    %v811 = vunpack.c.h.b16 %v230
    %v812 = vunpack.c.l.b16 %v231
    %v813 = vunpack.c.h.b16 %v231
    %v814 = vunpack.c.l.b16 %v232
    %v815 = vunpack.c.h.b16 %v232
    %v816 = vunpack.c.l.b16 %v233
    %v817 = vunpack.c.h.b16 %v233
    %v818 = vunpack.c.l.b16 %v234
    %v819 = vunpack.c.h.b16 %v234
    %v820 = vunpack.c.l.b16 %v235
    %v821 = vunpack.c.h.b16 %v235
    %v822 = vunpack.c.l.b16 %v236
    %v823 = vunpack.c.h.b16 %v236
    %v824 = vunpack.c.l.b16 %v237
    %v825 = vunpack.c.h.b16 %v237
    %v826 = vunpack.c.l.b16 %v238
    %v827 = vunpack.c.h.b16 %v238
    %v828 = vunpack.c.l.b16 %v239
    %v829 = vunpack.c.h.b16 %v239
    %v830 = vunpack.c.l.b16 %v240
    %v831 = vunpack.c.h.b16 %v240
    %v832 = vunpack.c.l.b16 %v241
    %v833 = vunpack.c.h.b16 %v241
    %v834 = vunpack.c.l.b16 %v242
    %v835 = vunpack.c.h.b16 %v242
    %v836 = vunpack.c.l.b16 %v243
    %v837 = vunpack.c.h.b16 %v243
    %v838 = vunpack.c.l.b16 %v244
    %v839 = vunpack.c.h.b16 %v244
    %v840 = vunpack.c.l.b16 %v245
    %v841 = vunpack.c.h.b16 %v245
    %v842 = vunpack.c.l.b16 %v246
    %v843 = vunpack.c.h.b16 %v246
    %v844 = vunpack.c.l.b16 %v247
    %v845 = vunpack.c.h.b16 %v247
    %v846 = vunpack.c.l.b16 %v248
    %v847 = vunpack.c.h.b16 %v248
    %v848 = vunpack.c.l.b16 %v249
    %v849 = vunpack.c.h.b16 %v249
    %v850 = vunpack.c.l.b16 %v250
    %v851 = vunpack.c.h.b16 %v250
    %v852 = vunpack.c.l.b16 %v251
    %v853 = vunpack.c.h.b16 %v251
    %v854 = vunpack.c.l.b16 %v252
    %v855 = vunpack.c.h.b16 %v252
    %v856 = vunpack.c.l.b16 %v253
    %v857 = vunpack.c.h.b16 %v253
    %v858 = vunpack.c.l.b16 %v254
    %v859 = vunpack.c.h.b16 %v254
    %v860 = vunpack.c.l.b16 %v255
    %v861 = vunpack.c.h.b16 %v255
    %v862 = vunpack.c.l.b16 %v256
    %v863 = vunpack.c.h.b16 %v256
    %v864 = vunpack.c.l.b16 %v257
    %v865 = vunpack.c.h.b16 %v257
    %v866 = vunpack.c.l.b16 %v258
    %v867 = vunpack.c.h.b16 %v258
    %v868 = vunpack.c.l.b16 %v259
    %v869 = vunpack.c.h.b16 %v259
    %v870 = vunpack.c.l.b16 %v260
    %v871 = vunpack.c.h.b16 %v260
    %v872 = vunpack.c.l.b16 %v261
    %v873 = vunpack.c.h.b16 %v261
    %v874 = vunpack.c.l.b16 %v262
    %v875 = vunpack.c.h.b16 %v262
    %v876 = vunpack.c.l.b16 %v263
    %v877 = vunpack.c.h.b16 %v263
    %v878 = vunpack.c.l.b16 %v264
    %v879 = vunpack.c.h.b16 %v264
    %v880 = vunpack.c.l.b16 %v265
    %v881 = vunpack.c.h.b16 %v265
    %v882 = vunpack.c.l.b16 %v266
    %v883 = vunpack.c.h.b16 %v266
    %v884 = vunpack.c.l.b16 %v267
    %v885 = vunpack.c.h.b16 %v267
    %v886 = vunpack.c.l.b16 %v268
    %v887 = vunpack.c.h.b16 %v268
    %v888 = vunpack.c.l.b16 %v269
    %v889 = vunpack.c.h.b16 %v269
    %v890 = vunpack.c.l.b16 %v270
    %v891 = vunpack.c.h.b16 %v270
    %v892 = vunpack.c.l.b16 %v271
    %v893 = vunpack.c.h.b16 %v271
    %v894 = vunpack.c.l.b16 %v272
    %v895 = vunpack.c.h.b16 %v272
    %v896 = vunpack.c.l.b16 %v273
    %v897 = vunpack.c.h.b16 %v273
    %v898 = vunpack.c.l.b16 %v274
    %v899 = vunpack.c.h.b16 %v274
    %v900 = vunpack.c.l.b16 %v275
    %v901 = vunpack.c.h.b16 %v275
    %v902 = vunpack.c.l.b16 %v276
    %v903 = vunpack.c.h.b16 %v276
    %v904 = vunpack.c.l.b16 %v277
    %v905 = vunpack.c.h.b16 %v277
    %v906 = vunpack.c.l.b16 %v278
    %v907 = vunpack.c.h.b16 %v278
    %v908 = vunpack.c.l.b16 %v279
    %v909 = vunpack.c.h.b16 %v279
    %v910 = vunpack.c.l.b16 %v280
    %v911 = vunpack.c.h.b16 %v280
    %v912 = vunpack.c.l.b16 %v281
    %v913 = vunpack.c.h.b16 %v281
    %v914 = vunpack.c.l.b16 %v282
    %v915 = vunpack.c.h.b16 %v282
    %v916 = vunpack.c.l.b16 %v283
    %v917 = vunpack.c.h.b16 %v283
    %v918 = vunpack.c.l.b16 %v284
    %v919 = vunpack.c.h.b16 %v284
    %v920 = vunpack.c.l.b16 %v285
    %v921 = vunpack.c.h.b16 %v285
    %v922 = vunpack.c.l.b16 %v286
    %v923 = vunpack.c.h.b16 %v286
    %v924 = vunpack.c.l.b16 %v287
    %v925 = vunpack.c.h.b16 %v287
    %v926 = vunpack.c.l.b16 %v288
    %v927 = vunpack.c.h.b16 %v288
    %v928 = vunpack.c.l.b16 %v289
    %v929 = vunpack.c.h.b16 %v289
    %v930 = vunpack.c.l.b16 %v290
    %v931 = vunpack.c.h.b16 %v290
    %v932 = vunpack.c.l.b16 %v291
    %v933 = vunpack.c.h.b16 %v291
    %v934 = vunpack.c.l.b16 %v292
    %v935 = vunpack.c.h.b16 %v292
    %v936 = vunpack.c.l.b16 %v293
    %v937 = vunpack.c.h.b16 %v293
    %v938 = vunpack.c.l.b16 %v294
    %v939 = vunpack.c.h.b16 %v294
    %v940 = vunpack.c.l.b16 %v295
    %v941 = vunpack.c.h.b16 %v295
    %v942 = vunpack.c.l.b16 %v296
    %v943 = vunpack.c.h.b16 %v296
    %v944 = vunpack.c.l.b16 %v297
    %v945 = vunpack.c.h.b16 %v297
    %v946 = vunpack.c.l.b16 %v298
    %v947 = vunpack.c.h.b16 %v298
    %v948 = vunpack.c.l.b16 %v299
    %v949 = vunpack.c.h.b16 %v299
    %v950 = vunpack.c.l.b16 %v300
    %v951 = vunpack.c.h.b16 %v300
    %v952 = vunpack.c.l.b16 %v301
    %v953 = vunpack.c.h.b16 %v301
    %v954 = vunpack.c.l.b16 %v302
    %v955 = vunpack.c.h.b16 %v302
    %v956 = vunpack.c.l.b16 %v303
    %v957 = vunpack.c.h.b16 %v303
    %v958 = vunpack.c.l.b16 %v304
    %v959 = vunpack.c.h.b16 %v304
    %v960 = vunpack.c.l.b16 %v305
    %v961 = vunpack.c.h.b16 %v305
    %v962 = vunpack.c.l.b16 %v306
    %v963 = vunpack.c.h.b16 %v306
    %v964 = vunpack.c.l.b16 %v307
    %v965 = vunpack.c.h.b16 %v307
    %v966 = vunpack.c.l.b16 %v308
    %v967 = vunpack.c.h.b16 %v308
    %v968 = vunpack.c.l.b16 %v309
    %v969 = vunpack.c.h.b16 %v309
    %v970 = vunpack.c.l.b16 %v310
    %v971 = vunpack.c.h.b16 %v310
    %v972 = vunpack.c.l.b16 %v311
    %v973 = vunpack.c.h.b16 %v311
    %v974 = vunpack.c.l.b16 %v312
    %v975 = vunpack.c.h.b16 %v312
    %v976 = vunpack.c.l.b16 %v313
    %v977 = vunpack.c.h.b16 %v313
    %v978 = vunpack.c.l.b16 %v314
    %v979 = vunpack.c.h.b16 %v314
    %v980 = vunpack.c.l.b16 %v315
    %v981 = vunpack.c.h.b16 %v315
    %v982 = vunpack.c.l.b16 %v316
    %v983 = vunpack.c.h.b16 %v316
    %v984 = vunpack.c.l.b16 %v317
    %v985 = vunpack.c.h.b16 %v317
    %v986 = vunpack.c.l.b16 %v318
    %v987 = vunpack.c.h.b16 %v318
    %v988 = vunpack.c.l.b16 %v319
    %v989 = vunpack.c.h.b16 %v319
    %v990 = vunpack.c.l.b16 %v320
    %v991 = vunpack.c.h.b16 %v320
    %v992 = vunpack.c.l.b16 %v321
    %v993 = vunpack.c.h.b16 %v321
    %v994 = vunpack.c.l.b16 %v322
    %v995 = vunpack.c.h.b16 %v322
    %v996 = vunpack.c.l.b16 %v323
    %v997 = vunpack.c.h.b16 %v323
    %v998 = vunpack.c.l.b16 %v324
    %v999 = vunpack.c.h.b16 %v324
    %v1000 = vunpack.c.l.b16 %v325
    %v1001 = vunpack.c.h.b16 %v325
    %v1002 = vunpack.c.l.b16 %v326
    %v1003 = vunpack.c.h.b16 %v326
    %v1004 = vunpack.c.l.b16 %v327
    %v1005 = vunpack.c.h.b16 %v327
    %v1006 = vunpack.c.l.b16 %v328
    %v1007 = vunpack.c.h.b16 %v328
    %v1008 = vunpack.c.l.b16 %v329
    %v1009 = vunpack.c.h.b16 %v329
    %v1010 = vunpack.c.l.b16 %v330
    %v1011 = vunpack.c.h.b16 %v330
    %v1012 = vunpack.c.l.b16 %v331
    %v1013 = vunpack.c.h.b16 %v331
    %v1014 = vunpack.c.l.b16 %v332
    %v1015 = vunpack.c.h.b16 %v332
    %v1016 = vunpack.c.l.b16 %v333
    %v1017 = vunpack.c.h.b16 %v333
    %v1018 = vunpack.c.l.b16 %v334
    %v1019 = vunpack.c.h.b16 %v334
    %v1020 = vunpack.c.l.b16 %v335
    %v1021 = vunpack.c.h.b16 %v335
    %v1022 = vunpack.c.l.b16 %v336
    %v1023 = vunpack.c.h.b16 %v336
    %v1024 = vunpack.c.l.b16 %v337
    %v1025 = vunpack.c.h.b16 %v337
    %v1026 = vunpack.c.l.b16 %v338
    %v1027 = vunpack.c.h.b16 %v338
    %v1028 = vunpack.c.l.b16 %v339
    %v1029 = vunpack.c.h.b16 %v339
    %v1030 = vunpack.c.l.b16 %v340
    %v1031 = vunpack.c.h.b16 %v340
    %v1032 = vunpack.c.l.b16 %v341
    %v1033 = vunpack.c.h.b16 %v341
    %v1034 = vunpack.c.l.b16 %v342
    %v1035 = vunpack.c.h.b16 %v342
    %v1036 = vunpack.c.l.b16 %v343
    %v1037 = vunpack.c.h.b16 %v343
    %v1038 = vpack.c.b16 %v594, %v590
    %v1039 = vpack.c.b16 %v595, %v591
    %v1040 = vpack.c.b16 %v596, %v592
    %v1041 = vpack.c.b16 %v597, %v593
    %v1042 = vpack.c.b16 %v602, %v598
    %v1043 = vpack.c.b16 %v603, %v599
    %v1044 = vpack.c.b16 %v604, %v600
    %v1045 = vpack.c.b16 %v605, %v601
    %v1046 = vpack.c.b16 %v610, %v606
    %v1047 = vpack.c.b16 %v611, %v607
    %v1048 = vpack.c.b16 %v612, %v608
    %v1049 = vpack.c.b16 %v613, %v609
    %v1050 = vpack.c.b16 %v618, %v614
    %v1051 = vpack.c.b16 %v619, %v615
    %v1052 = vpack.c.b16 %v620, %v616
    %v1053 = vpack.c.b16 %v621, %v617
    %v1054 = vpack.c.b16 %v626, %v622
    %v1055 = vpack.c.b16 %v627, %v623
    %v1056 = vpack.c.b16 %v628, %v624
    %v1057 = vpack.c.b16 %v629, %v625
    %v1058 = vpack.c.b16 %v634, %v630
    %v1059 = vpack.c.b16 %v635, %v631
    %v1060 = vpack.c.b16 %v636, %v632
    %v1061 = vpack.c.b16 %v637, %v633
    %v1062 = vpack.c.b16 %v642, %v638
    %v1063 = vpack.c.b16 %v643, %v639
    %v1064 = vpack.c.b16 %v644, %v640
    %v1065 = vpack.c.b16 %v645, %v641
    %v1066 = vpack.c.b16 %v650, %v646
    %v1067 = vpack.c.b16 %v651, %v647
    %v1068 = vpack.c.b16 %v652, %v648
    %v1069 = vpack.c.b16 %v653, %v649
    %v1070 = vpack.c.b16 %v658, %v654
    %v1071 = vpack.c.b16 %v659, %v655
    %v1072 = vpack.c.b16 %v660, %v656
    %v1073 = vpack.c.b16 %v661, %v657
    %v1074 = vpack.c.b16 %v666, %v662
    %v1075 = vpack.c.b16 %v667, %v663
    %v1076 = vpack.c.b16 %v668, %v664
    %v1077 = vpack.c.b16 %v669, %v665
    %v1078 = vpack.c.b16 %v674, %v670
    %v1079 = vpack.c.b16 %v675, %v671
    %v1080 = vpack.c.b16 %v676, %v672
    %v1081 = vpack.c.b16 %v677, %v673
    %v1082 = vpack.c.b16 %v682, %v678
    %v1083 = vpack.c.b16 %v683, %v679
    %v1084 = vpack.c.b16 %v684, %v680
    %v1085 = vpack.c.b16 %v685, %v681
    %v1086 = vpack.c.b16 %v690, %v686
    %v1087 = vpack.c.b16 %v691, %v687
    %v1088 = vpack.c.b16 %v692, %v688
    %v1089 = vpack.c.b16 %v693, %v689
    %v1090 = vpack.c.b16 %v698, %v694
    %v1091 = vpack.c.b16 %v699, %v695
    %v1092 = vpack.c.b16 %v700, %v696
    %v1093 = vpack.c.b16 %v701, %v697
    %v1094 = vpack.c.b16 %v706, %v702
    %v1095 = vpack.c.b16 %v707, %v703
    %v1096 = vpack.c.b16 %v708, %v704
    %v1097 = vpack.c.b16 %v709, %v705
    %v1098 = vpack.c.b16 %v714, %v710
    %v1099 = vpack.c.b16 %v715, %v711
    %v1100 = vpack.c.b16 %v716, %v712
    %v1101 = vpack.c.b16 %v717, %v713
    %v1102 = vpack.c.b16 %v722, %v718
    %v1103 = vpack.c.b16 %v723, %v719
    %v1104 = vpack.c.b16 %v724, %v720
    %v1105 = vpack.c.b16 %v725, %v721
    %v1106 = vpack.c.b16 %v730, %v726
    %v1107 = vpack.c.b16 %v731, %v727
    %v1108 = vpack.c.b16 %v732, %v728
    %v1109 = vpack.c.b16 %v733, %v729
    %v1110 = vpack.c.b16 %v738, %v734
    %v1111 = vpack.c.b16 %v739, %v735
    %v1112 = vpack.c.b16 %v740, %v736
    %v1113 = vpack.c.b16 %v741, %v737
    %v1114 = vpack.c.b16 %v746, %v742
    %v1115 = vpack.c.b16 %v747, %v743
    %v1116 = vpack.c.b16 %v748, %v744
    %v1117 = vpack.c.b16 %v749, %v745
    %v1118 = vpack.c.b16 %v754, %v750
    %v1119 = vpack.c.b16 %v755, %v751
    %v1120 = vpack.c.b16 %v756, %v752
    %v1121 = vpack.c.b16 %v757, %v753
    %v1122 = vpack.c.b16 %v762, %v758
    %v1123 = vpack.c.b16 %v763, %v759
    %v1124 = vpack.c.b16 %v764, %v760
    %v1125 = vpack.c.b16 %v765, %v761
    %v1126 = vpack.c.b16 %v770, %v766
    %v1127 = vpack.c.b16 %v771, %v767
    %v1128 = vpack.c.b16 %v772, %v768
    %v1129 = vpack.c.b16 %v773, %v769
    %v1130 = vpack.c.b16 %v778, %v774
    %v1131 = vpack.c.b16 %v779, %v775
    %v1132 = vpack.c.b16 %v780, %v776
    %v1133 = vpack.c.b16 %v781, %v777
    %v1134 = vpack.c.b16 %v786, %v782
    %v1135 = vpack.c.b16 %v787, %v783
    %v1136 = vpack.c.b16 %v788, %v784
    %v1137 = vpack.c.b16 %v789, %v785
    %v1138 = vpack.c.b16 %v794, %v790
    %v1139 = vpack.c.b16 %v795, %v791
    %v1140 = vpack.c.b16 %v796, %v792
    %v1141 = vpack.c.b16 %v797, %v793
    %v1142 = vpack.c.b16 %v802, %v798
    %v1143 = vpack.c.b16 %v803, %v799
    %v1144 = vpack.c.b16 %v804, %v800
    %v1145 = vpack.c.b16 %v805, %v801
    %v1146 = vpack.c.b16 %v810, %v806
    %v1147 = vpack.c.b16 %v811, %v807
    %v1148 = vpack.c.b16 %v812, %v808
    %v1149 = vpack.c.b16 %v813, %v809
    %v1150 = vpack.c.b16 %v818, %v814
    %v1151 = vpack.c.b16 %v819, %v815
    %v1152 = vpack.c.b16 %v820, %v816
    %v1153 = vpack.c.b16 %v821, %v817
    %v1154 = vpack.c.b16 %v826, %v822
    %v1155 = vpack.c.b16 %v827, %v823
    %v1156 = vpack.c.b16 %v828, %v824
    %v1157 = vpack.c.b16 %v829, %v825
    %v1158 = vpack.c.b16 %v834, %v830
    %v1159 = vpack.c.b16 %v835, %v831
    %v1160 = vpack.c.b16 %v836, %v832
    %v1161 = vpack.c.b16 %v837, %v833
    %v1162 = vpack.c.b16 %v842, %v838
    %v1163 = vpack.c.b16 %v843, %v839
    %v1164 = vpack.c.b16 %v844, %v840
    %v1165 = vpack.c.b16 %v845, %v841
    %v1166 = vpack.c.b16 %v850, %v846
    %v1167 = vpack.c.b16 %v851, %v847
    %v1168 = vpack.c.b16 %v852, %v848
    %v1169 = vpack.c.b16 %v853, %v849
    %v1170 = vpack.c.b16 %v858, %v854
    %v1171 = vpack.c.b16 %v859, %v855
    %v1172 = vpack.c.b16 %v860, %v856
    %v1173 = vpack.c.b16 %v861, %v857
    %v1174 = vpack.c.b16 %v866, %v862
    %v1175 = vpack.c.b16 %v867, %v863
    %v1176 = vpack.c.b16 %v868, %v864
    %v1177 = vpack.c.b16 %v869, %v865
    %v1178 = vpack.c.b16 %v874, %v870
    %v1179 = vpack.c.b16 %v875, %v871
    %v1180 = vpack.c.b16 %v876, %v872
    %v1181 = vpack.c.b16 %v877, %v873
    %v1182 = vpack.c.b16 %v882, %v878
    %v1183 = vpack.c.b16 %v883, %v879
    %v1184 = vpack.c.b16 %v884, %v880
    %v1185 = vpack.c.b16 %v885, %v881
    %v1186 = vpack.c.b16 %v890, %v886
    %v1187 = vpack.c.b16 %v891, %v887
    %v1188 = vpack.c.b16 %v892, %v888
    %v1189 = vpack.c.b16 %v893, %v889
    %v1190 = vpack.c.b16 %v898, %v894
    %v1191 = vpack.c.b16 %v899, %v895
    %v1192 = vpack.c.b16 %v900, %v896
    %v1193 = vpack.c.b16 %v901, %v897
    %v1194 = vpack.c.b16 %v906, %v902
    %v1195 = vpack.c.b16 %v907, %v903
    %v1196 = vpack.c.b16 %v908, %v904
    %v1197 = vpack.c.b16 %v909, %v905
    %v1198 = vpack.c.b16 %v914, %v910
    %v1199 = vpack.c.b16 %v915, %v911
    %v1200 = vpack.c.b16 %v916, %v912
    %v1201 = vpack.c.b16 %v917, %v913
    %v1202 = vpack.c.b16 %v922, %v918
    %v1203 = vpack.c.b16 %v923, %v919
    %v1204 = vpack.c.b16 %v924, %v920
    %v1205 = vpack.c.b16 %v925, %v921
    %v1206 = vpack.c.b16 %v930, %v926
    %v1207 = vpack.c.b16 %v931, %v927
    %v1208 = vpack.c.b16 %v932, %v928
    %v1209 = vpack.c.b16 %v933, %v929
    %v1210 = vpack.c.b16 %v938, %v934
    %v1211 = vpack.c.b16 %v939, %v935
    %v1212 = vpack.c.b16 %v940, %v936
    %v1213 = vpack.c.b16 %v941, %v937
    %v1214 = vpack.c.b16 %v946, %v942
    %v1215 = vpack.c.b16 %v947, %v943
    %v1216 = vpack.c.b16 %v948, %v944
    %v1217 = vpack.c.b16 %v949, %v945
    %v1218 = vpack.c.b16 %v954, %v950
    %v1219 = vpack.c.b16 %v955, %v951
    %v1220 = vpack.c.b16 %v956, %v952
    %v1221 = vpack.c.b16 %v957, %v953
    %v1222 = vpack.c.b16 %v962, %v958
    %v1223 = vpack.c.b16 %v963, %v959
    %v1224 = vpack.c.b16 %v964, %v960
    %v1225 = vpack.c.b16 %v965, %v961
    %v1226 = vpack.c.b16 %v970, %v966
    %v1227 = vpack.c.b16 %v971, %v967
    %v1228 = vpack.c.b16 %v972, %v968
    %v1229 = vpack.c.b16 %v973, %v969
    %v1230 = vpack.c.b16 %v978, %v974
    %v1231 = vpack.c.b16 %v979, %v975
    %v1232 = vpack.c.b16 %v980, %v976
    %v1233 = vpack.c.b16 %v981, %v977
    %v1234 = vpack.c.b16 %v986, %v982
    %v1235 = vpack.c.b16 %v987, %v983
    %v1236 = vpack.c.b16 %v988, %v984
    %v1237 = vpack.c.b16 %v989, %v985
    %v1238 = vpack.c.b16 %v994, %v990
    %v1239 = vpack.c.b16 %v995, %v991
    %v1240 = vpack.c.b16 %v996, %v992
    %v1241 = vpack.c.b16 %v997, %v993
    %v1242 = vpack.c.b16 %v1002, %v998
    %v1243 = vpack.c.b16 %v1003, %v999
    %v1244 = vpack.c.b16 %v1004, %v1000
    %v1245 = vpack.c.b16 %v1005, %v1001
    %v1246 = vpack.c.b16 %v1010, %v1006
    %v1247 = vpack.c.b16 %v1011, %v1007
    %v1248 = vpack.c.b16 %v1012, %v1008
    %v1249 = vpack.c.b16 %v1013, %v1009
    %v1250 = vpack.c.b16 %v1018, %v1014
    %v1251 = vpack.c.b16 %v1019, %v1015
    %v1252 = vpack.c.b16 %v1020, %v1016
    %v1253 = vpack.c.b16 %v1021, %v1017
    %v1254 = vpack.c.b16 %v1026, %v1022
    %v1255 = vpack.c.b16 %v1027, %v1023
    %v1256 = vpack.c.b16 %v1028, %v1024
    %v1257 = vpack.c.b16 %v1029, %v1025
    %v1258 = vpack.c.b16 %v1034, %v1030
    %v1259 = vpack.c.b16 %v1035, %v1031
    %v1260 = vpack.c.b16 %v1036, %v1032
    %v1261 = vpack.c.b16 %v1037, %v1033
    %1486 = vmatprep.subr.bf16.mxu0 %v1039
    %1487 = vmatpush1.bf16.msra.mxu0 %v1038
    %1488 = vmatprep.subr.bf16.mxu0 %v1043
    %1489 = vmatpush1.bf16.msra.mxu0 %v1042
    %1490 = vmatprep.subr.bf16.mxu0 %v1047
    %1491 = vmatpush1.bf16.msra.mxu0 %v1046
    %1492 = vmatprep.subr.bf16.mxu0 %v1051
    %1493 = vmatpush1.bf16.msra.mxu0 %v1050
    %1494 = vmatprep.subr.bf16.mxu0 %v1055
    %1495 = vmatpush1.bf16.msra.mxu0 %v1054
    %1496 = vmatprep.subr.bf16.mxu0 %v1059
    %1497 = vmatpush1.bf16.msra.mxu0 %v1058
    %1498 = vmatprep.subr.bf16.mxu0 %v1063
    %1499 = vmatpush1.bf16.msra.mxu0 %v1062
    %1500 = vmatprep.subr.bf16.mxu0 %v1067
    %1501 = vmatpush1.bf16.msra.mxu0 %v1066
    %1502 = vmatprep.subr.bf16.mxu0 %v1071
    %1503 = vmatpush1.bf16.msra.mxu0 %v1070
    %1504 = vmatprep.subr.bf16.mxu0 %v1075
    %1505 = vmatpush1.bf16.msra.mxu0 %v1074
    %1506 = vmatprep.subr.bf16.mxu0 %v1079
    %1507 = vmatpush1.bf16.msra.mxu0 %v1078
    %1508 = vmatprep.subr.bf16.mxu0 %v1083
    %1509 = vmatpush1.bf16.msra.mxu0 %v1082
    %1510 = vmatprep.subr.bf16.mxu0 %v1087
    %1511 = vmatpush1.bf16.msra.mxu0 %v1086
    %1512 = vmatprep.subr.bf16.mxu0 %v1091
    %1513 = vmatpush1.bf16.msra.mxu0 %v1090
    %1514 = vmatprep.subr.bf16.mxu0 %v1095
    %1515 = vmatpush1.bf16.msra.mxu0 %v1094
    %1516 = vmatprep.subr.bf16.mxu0 %v1099
    %1517 = vmatpush1.bf16.msra.mxu0 %v1098
    %1518 = vmatprep.mubr.bf16.mxu0 %v114
    %1519 = vmatmul.mubr.bf16.gmra.mrb[0].mxu0 %v113
    %v1520 = vpop.f32.mrb[0].mxu0
    %v1521 = vadd.f32 %v349, %v1520
    %v1522 = vpop.f32.mrb[0].mxu0
    %v1523 = vadd.f32 %v353, %v1522
    %v1524 = vpop.f32.mrb[0].mxu0
    %v1525 = vadd.f32 %v349, %v1524
    %v1526 = vpop.f32.mrb[0].mxu0
    %v1527 = vadd.f32 %v353, %v1526
    %1528 = vdwg.mxu0
    %1529 = vmatprep.subr.bf16.mxu0 %v1103
    %1530 = vmatpush1.bf16.msra.mxu0 %v1102
    %1531 = vmatprep.subr.bf16.mxu0 %v1107
    %1532 = vmatpush1.bf16.msra.mxu0 %v1106
    %1533 = vmatprep.subr.bf16.mxu0 %v1111
    %1534 = vmatpush1.bf16.msra.mxu0 %v1110
    %1535 = vmatprep.subr.bf16.mxu0 %v1115
    %1536 = vmatpush1.bf16.msra.mxu0 %v1114
    %1537 = vmatprep.subr.bf16.mxu0 %v1119
    %1538 = vmatpush1.bf16.msra.mxu0 %v1118
    %1539 = vmatprep.subr.bf16.mxu0 %v1123
    %1540 = vmatpush1.bf16.msra.mxu0 %v1122
    %1541 = vmatprep.subr.bf16.mxu0 %v1127
    %1542 = vmatpush1.bf16.msra.mxu0 %v1126
    %1543 = vmatprep.subr.bf16.mxu0 %v1131
    %1544 = vmatpush1.bf16.msra.mxu0 %v1130
    %1545 = vmatprep.subr.bf16.mxu0 %v1135
    %1546 = vmatpush1.bf16.msra.mxu0 %v1134
    %1547 = vmatprep.subr.bf16.mxu0 %v1139
    %1548 = vmatpush1.bf16.msra.mxu0 %v1138
    %1549 = vmatprep.subr.bf16.mxu0 %v1143
    %1550 = vmatpush1.bf16.msra.mxu0 %v1142
    %1551 = vmatprep.subr.bf16.mxu0 %v1147
    %1552 = vmatpush1.bf16.msra.mxu0 %v1146
    %1553 = vmatprep.subr.bf16.mxu0 %v1151
    %1554 = vmatpush1.bf16.msra.mxu0 %v1150
    %1555 = vmatprep.subr.bf16.mxu0 %v1155
    %1556 = vmatpush1.bf16.msra.mxu0 %v1154
    %1557 = vmatprep.subr.bf16.mxu0 %v1159
    %1558 = vmatpush1.bf16.msra.mxu0 %v1158
    %1559 = vmatprep.subr.bf16.mxu0 %v1163
    %1560 = vmatpush1.bf16.msra.mxu0 %v1162
    %1561 = vmatprep.mubr.bf16.mxu0 %v116
    %1562 = vmatmul.mubr.bf16.gmra.mrb[0].mxu0 %v115
    %v1563 = vpop.f32.mrb[0].mxu0
    %v1564 = vadd.f32 %v1521, %v1563
    %v1565 = vpop.f32.mrb[0].mxu0
    %v1566 = vadd.f32 %v1523, %v1565
    %v1567 = vpop.f32.mrb[0].mxu0
    %v1568 = vadd.f32 %v1525, %v1567
    %v1569 = vpop.f32.mrb[0].mxu0
    %v1570 = vadd.f32 %v1527, %v1569
    %1571 = vdwg.mxu0
    %1572 = vmatprep.subr.bf16.mxu0 %v1167
    %1573 = vmatpush1.bf16.msra.mxu0 %v1166
    %1574 = vmatprep.subr.bf16.mxu0 %v1171
    %1575 = vmatpush1.bf16.msra.mxu0 %v1170
    %1576 = vmatprep.subr.bf16.mxu0 %v1175
    %1577 = vmatpush1.bf16.msra.mxu0 %v1174
    %1578 = vmatprep.subr.bf16.mxu0 %v1179
    %1579 = vmatpush1.bf16.msra.mxu0 %v1178
    %1580 = vmatprep.subr.bf16.mxu0 %v1183
    %1581 = vmatpush1.bf16.msra.mxu0 %v1182
    %1582 = vmatprep.subr.bf16.mxu0 %v1187
    %1583 = vmatpush1.bf16.msra.mxu0 %v1186
    %1584 = vmatprep.subr.bf16.mxu0 %v1191
    %1585 = vmatpush1.bf16.msra.mxu0 %v1190
    %1586 = vmatprep.subr.bf16.mxu0 %v1195
    %1587 = vmatpush1.bf16.msra.mxu0 %v1194
    %1588 = vmatprep.subr.bf16.mxu0 %v1199
    %1589 = vmatpush1.bf16.msra.mxu0 %v1198
    %1590 = vmatprep.subr.bf16.mxu0 %v1203
    %1591 = vmatpush1.bf16.msra.mxu0 %v1202
    %1592 = vmatprep.subr.bf16.mxu0 %v1207
    %1593 = vmatpush1.bf16.msra.mxu0 %v1206
    %1594 = vmatprep.subr.bf16.mxu0 %v1211
    %1595 = vmatpush1.bf16.msra.mxu0 %v1210
    %1596 = vmatprep.subr.bf16.mxu0 %v1215
    %1597 = vmatpush1.bf16.msra.mxu0 %v1214
    %1598 = vmatprep.subr.bf16.mxu0 %v1219
    %1599 = vmatpush1.bf16.msra.mxu0 %v1218
    %1600 = vmatprep.subr.bf16.mxu0 %v1223
    %1601 = vmatpush1.bf16.msra.mxu0 %v1222
    %1602 = vmatprep.subr.bf16.mxu0 %v1227
    %1603 = vmatpush1.bf16.msra.mxu0 %v1226
    %1604 = vmatprep.mubr.bf16.mxu0 %v118
    %1605 = vmatmul.mubr.bf16.gmra.mrb[0].mxu0 %v117
    %v1606 = vpop.f32.mrb[0].mxu0
    %v1607 = vadd.f32 %v1564, %v1606
    %v1608 = vpop.f32.mrb[0].mxu0
    %v1609 = vadd.f32 %v1566, %v1608
    %v1610 = vpop.f32.mrb[0].mxu0
    %v1611 = vadd.f32 %v1568, %v1610
    %v1612 = vpop.f32.mrb[0].mxu0
    %v1613 = vadd.f32 %v1570, %v1612
    %1614 = vdwg.mxu0
    %1615 = vmatprep.subr.bf16.mxu0 %v1231
    %1616 = vmatpush1.bf16.msra.mxu0 %v1230
    %1617 = vmatprep.subr.bf16.mxu0 %v1235
    %1618 = vmatpush1.bf16.msra.mxu0 %v1234
    %1619 = vmatprep.subr.bf16.mxu0 %v1239
    %1620 = vmatpush1.bf16.msra.mxu0 %v1238
    %1621 = vmatprep.subr.bf16.mxu0 %v1243
    %1622 = vmatpush1.bf16.msra.mxu0 %v1242
    %1623 = vmatprep.subr.bf16.mxu0 %v1247
    %1624 = vmatpush1.bf16.msra.mxu0 %v1246
    %1625 = vmatprep.subr.bf16.mxu0 %v1251
    %1626 = vmatpush1.bf16.msra.mxu0 %v1250
    %1627 = vmatprep.subr.bf16.mxu0 %v1255
    %1628 = vmatpush1.bf16.msra.mxu0 %v1254
    %1629 = vmatprep.subr.bf16.mxu0 %v1259
    %1630 = vmatpush1.bf16.msra.mxu0 %v1258
    %1631 = vmatprep.subr.bf16.mxu0 0
    %1632 = vmatpush1.bf16.msra.mxu0 0
    %1633 = vmatprep.subr.bf16.mxu0 0
    %1634 = vmatpush1.bf16.msra.mxu0 0
    %1635 = vmatprep.subr.bf16.mxu0 0
    %1636 = vmatpush1.bf16.msra.mxu0 0
    %1637 = vmatprep.subr.bf16.mxu0 0
    %1638 = vmatpush1.bf16.msra.mxu0 0
    %1639 = vmatprep.subr.bf16.mxu0 0
    %1640 = vmatpush1.bf16.msra.mxu0 0
    %1641 = vmatprep.subr.bf16.mxu0 0
    %1642 = vmatpush1.bf16.msra.mxu0 0
    %1643 = vmatprep.subr.bf16.mxu0 0
    %1644 = vmatpush1.bf16.msra.mxu0 0
    %1645 = vmatprep.subr.bf16.mxu0 0
    %1646 = vmatpush1.bf16.msra.mxu0 0
    %1647 = vmatprep.mubr.bf16.mxu0 0
    %1648 = vmatmul.mubr.bf16.gmra.mrb[0].mxu0 %v119
    %v1649 = vpop.f32.mrb[0].mxu0
    %v1650 = vadd.f32 %v1607, %v1649
    %v1651 = vpop.f32.mrb[0].mxu0
    %v1652 = vadd.f32 %v1609, %v1651
    %v1653 = vpop.f32.mrb[0].mxu0
    %v1654 = vadd.f32 %v1611, %v1653
    %v1655 = vpop.f32.mrb[0].mxu0
    %v1656 = vadd.f32 %v1613, %v1655
    %1657 = vdwg.mxu0
    %1658 = vmatprep.subr.bf16.mxu0 %v1041
    %1659 = vmatpush1.bf16.msra.mxu0 %v1040
    %1660 = vmatprep.subr.bf16.mxu0 %v1045
    %1661 = vmatpush1.bf16.msra.mxu0 %v1044
    %1662 = vmatprep.subr.bf16.mxu0 %v1049
    %1663 = vmatpush1.bf16.msra.mxu0 %v1048
    %1664 = vmatprep.subr.bf16.mxu0 %v1053
    %1665 = vmatpush1.bf16.msra.mxu0 %v1052
    %1666 = vmatprep.subr.bf16.mxu0 %v1057
    %1667 = vmatpush1.bf16.msra.mxu0 %v1056
    %1668 = vmatprep.subr.bf16.mxu0 %v1061
    %1669 = vmatpush1.bf16.msra.mxu0 %v1060
    %1670 = vmatprep.subr.bf16.mxu0 %v1065
    %1671 = vmatpush1.bf16.msra.mxu0 %v1064
    %1672 = vmatprep.subr.bf16.mxu0 %v1069
    %1673 = vmatpush1.bf16.msra.mxu0 %v1068
    %1674 = vmatprep.subr.bf16.mxu0 %v1073
    %1675 = vmatpush1.bf16.msra.mxu0 %v1072
    %1676 = vmatprep.subr.bf16.mxu0 %v1077
    %1677 = vmatpush1.bf16.msra.mxu0 %v1076
    %1678 = vmatprep.subr.bf16.mxu0 %v1081
    %1679 = vmatpush1.bf16.msra.mxu0 %v1080
    %1680 = vmatprep.subr.bf16.mxu0 %v1085
    %1681 = vmatpush1.bf16.msra.mxu0 %v1084
    %1682 = vmatprep.subr.bf16.mxu0 %v1089
    %1683 = vmatpush1.bf16.msra.mxu0 %v1088
    %1684 = vmatprep.subr.bf16.mxu0 %v1093
    %1685 = vmatpush1.bf16.msra.mxu0 %v1092
    %1686 = vmatprep.subr.bf16.mxu0 %v1097
    %1687 = vmatpush1.bf16.msra.mxu0 %v1096
    %1688 = vmatprep.subr.bf16.mxu0 %v1101
    %1689 = vmatpush1.bf16.msra.mxu0 %v1100
    %1690 = vmatprep.mubr.bf16.mxu0 %v114
    %1691 = vmatmul.mubr.bf16.gmra.mrb[0].mxu0 %v113
    %v1692 = vpop.f32.mrb[0].mxu0
    %v1693 = vadd.f32 %v357, %v1692
    %v1694 = vpop.f32.mrb[0].mxu0
    %v1695 = vadd.f32 %v361, %v1694
    %v1696 = vpop.f32.mrb[0].mxu0
    %v1697 = vadd.f32 %v357, %v1696
    %v1698 = vpop.f32.mrb[0].mxu0
    %v1699 = vadd.f32 %v361, %v1698
    %1700 = vdwg.mxu0
    %1701 = vmatprep.subr.bf16.mxu0 %v1105
    %1702 = vmatpush1.bf16.msra.mxu0 %v1104
    %1703 = vmatprep.subr.bf16.mxu0 %v1109
    %1704 = vmatpush1.bf16.msra.mxu0 %v1108
    %1705 = vmatprep.subr.bf16.mxu0 %v1113
    %1706 = vmatpush1.bf16.msra.mxu0 %v1112
    %1707 = vmatprep.subr.bf16.mxu0 %v1117
    %1708 = vmatpush1.bf16.msra.mxu0 %v1116
    %1709 = vmatprep.subr.bf16.mxu0 %v1121
    %1710 = vmatpush1.bf16.msra.mxu0 %v1120
    %1711 = vmatprep.subr.bf16.mxu0 %v1125
    %1712 = vmatpush1.bf16.msra.mxu0 %v1124
    %1713 = vmatprep.subr.bf16.mxu0 %v1129
    %1714 = vmatpush1.bf16.msra.mxu0 %v1128
    %1715 = vmatprep.subr.bf16.mxu0 %v1133
    %1716 = vmatpush1.bf16.msra.mxu0 %v1132
    %1717 = vmatprep.subr.bf16.mxu0 %v1137
    %1718 = vmatpush1.bf16.msra.mxu0 %v1136
    %1719 = vmatprep.subr.bf16.mxu0 %v1141
    %1720 = vmatpush1.bf16.msra.mxu0 %v1140
    %1721 = vmatprep.subr.bf16.mxu0 %v1145
    %1722 = vmatpush1.bf16.msra.mxu0 %v1144
    %1723 = vmatprep.subr.bf16.mxu0 %v1149
    %1724 = vmatpush1.bf16.msra.mxu0 %v1148
    %1725 = vmatprep.subr.bf16.mxu0 %v1153
    %1726 = vmatpush1.bf16.msra.mxu0 %v1152
    %1727 = vmatprep.subr.bf16.mxu0 %v1157
    %1728 = vmatpush1.bf16.msra.mxu0 %v1156
    %1729 = vmatprep.subr.bf16.mxu0 %v1161
    %1730 = vmatpush1.bf16.msra.mxu0 %v1160
    %1731 = vmatprep.subr.bf16.mxu0 %v1165
    %1732 = vmatpush1.bf16.msra.mxu0 %v1164
    %1733 = vmatprep.mubr.bf16.mxu0 %v116
    %1734 = vmatmul.mubr.bf16.gmra.mrb[0].mxu0 %v115
    %v1735 = vpop.f32.mrb[0].mxu0
    %v1736 = vadd.f32 %v1693, %v1735
    %v1737 = vpop.f32.mrb[0].mxu0
    %v1738 = vadd.f32 %v1695, %v1737
    %v1739 = vpop.f32.mrb[0].mxu0
    %v1740 = vadd.f32 %v1697, %v1739
    %v1741 = vpop.f32.mrb[0].mxu0
    %v1742 = vadd.f32 %v1699, %v1741
    %1743 = vdwg.mxu0
    %1744 = vmatprep.subr.bf16.mxu0 %v1169
    %1745 = vmatpush1.bf16.msra.mxu0 %v1168
    %1746 = vmatprep.subr.bf16.mxu0 %v1173
    %1747 = vmatpush1.bf16.msra.mxu0 %v1172
    %1748 = vmatprep.subr.bf16.mxu0 %v1177
    %1749 = vmatpush1.bf16.msra.mxu0 %v1176
    %1750 = vmatprep.subr.bf16.mxu0 %v1181
    %1751 = vmatpush1.bf16.msra.mxu0 %v1180
    %1752 = vmatprep.subr.bf16.mxu0 %v1185
    %1753 = vmatpush1.bf16.msra.mxu0 %v1184
    %1754 = vmatprep.subr.bf16.mxu0 %v1189
    %1755 = vmatpush1.bf16.msra.mxu0 %v1188
    %1756 = vmatprep.subr.bf16.mxu0 %v1193
    %1757 = vmatpush1.bf16.msra.mxu0 %v1192
    %1758 = vmatprep.subr.bf16.mxu0 %v1197
    %1759 = vmatpush1.bf16.msra.mxu0 %v1196
    %1760 = vmatprep.subr.bf16.mxu0 %v1201
    %1761 = vmatpush1.bf16.msra.mxu0 %v1200
    %1762 = vmatprep.subr.bf16.mxu0 %v1205
    %1763 = vmatpush1.bf16.msra.mxu0 %v1204
    %1764 = vmatprep.subr.bf16.mxu0 %v1209
    %1765 = vmatpush1.bf16.msra.mxu0 %v1208
    %1766 = vmatprep.subr.bf16.mxu0 %v1213
    %1767 = vmatpush1.bf16.msra.mxu0 %v1212
    %1768 = vmatprep.subr.bf16.mxu0 %v1217
    %1769 = vmatpush1.bf16.msra.mxu0 %v1216
    %1770 = vmatprep.subr.bf16.mxu0 %v1221
    %1771 = vmatpush1.bf16.msra.mxu0 %v1220
    %1772 = vmatprep.subr.bf16.mxu0 %v1225
    %1773 = vmatpush1.bf16.msra.mxu0 %v1224
    %1774 = vmatprep.subr.bf16.mxu0 %v1229
    %1775 = vmatpush1.bf16.msra.mxu0 %v1228
    %1776 = vmatprep.mubr.bf16.mxu0 %v118
    %1777 = vmatmul.mubr.bf16.gmra.mrb[0].mxu0 %v117
    %v1778 = vpop.f32.mrb[0].mxu0
    %v1779 = vadd.f32 %v1736, %v1778
    %v1780 = vpop.f32.mrb[0].mxu0
    %v1781 = vadd.f32 %v1738, %v1780
    %v1782 = vpop.f32.mrb[0].mxu0
    %v1783 = vadd.f32 %v1740, %v1782
    %v1784 = vpop.f32.mrb[0].mxu0
    %v1785 = vadd.f32 %v1742, %v1784
    %1786 = vdwg.mxu0
    %1787 = vmatprep.subr.bf16.mxu0 %v1233
    %1788 = vmatpush1.bf16.msra.mxu0 %v1232
    %1789 = vmatprep.subr.bf16.mxu0 %v1237
    %1790 = vmatpush1.bf16.msra.mxu0 %v1236
    %1791 = vmatprep.subr.bf16.mxu0 %v1241
    %1792 = vmatpush1.bf16.msra.mxu0 %v1240
    %1793 = vmatprep.subr.bf16.mxu0 %v1245
    %1794 = vmatpush1.bf16.msra.mxu0 %v1244
    %1795 = vmatprep.subr.bf16.mxu0 %v1249
    %1796 = vmatpush1.bf16.msra.mxu0 %v1248
    %1797 = vmatprep.subr.bf16.mxu0 %v1253
    %1798 = vmatpush1.bf16.msra.mxu0 %v1252
    %1799 = vmatprep.subr.bf16.mxu0 %v1257
    %1800 = vmatpush1.bf16.msra.mxu0 %v1256
    %1801 = vmatprep.subr.bf16.mxu0 %v1261
    %1802 = vmatpush1.bf16.msra.mxu0 %v1260
    %1803 = vmatprep.subr.bf16.mxu0 0
    %1804 = vmatpush1.bf16.msra.mxu0 0
    %1805 = vmatprep.subr.bf16.mxu0 0
    %1806 = vmatpush1.bf16.msra.mxu0 0
    %1807 = vmatprep.subr.bf16.mxu0 0
    %1808 = vmatpush1.bf16.msra.mxu0 0
    %1809 = vmatprep.subr.bf16.mxu0 0
    %1810 = vmatpush1.bf16.msra.mxu0 0
    %1811 = vmatprep.subr.bf16.mxu0 0
    %1812 = vmatpush1.bf16.msra.mxu0 0
    %1813 = vmatprep.subr.bf16.mxu0 0
    %1814 = vmatpush1.bf16.msra.mxu0 0
    %1815 = vmatprep.subr.bf16.mxu0 0
    %1816 = vmatpush1.bf16.msra.mxu0 0
    %1817 = vmatprep.subr.bf16.mxu0 0
    %1818 = vmatpush1.bf16.msra.mxu0 0
    %1819 = vmatprep.mubr.bf16.mxu0 0
    %1820 = vmatmul.mubr.bf16.gmra.mrb[0].mxu0 %v119
    %v1821 = vpop.f32.mrb[0].mxu0
    %v1822 = vadd.f32 %v1779, %v1821
    %v1823 = vpop.f32.mrb[0].mxu0
    %v1824 = vadd.f32 %v1781, %v1823
    %v1825 = vpop.f32.mrb[0].mxu0
    %v1826 = vadd.f32 %v1783, %v1825
    %v1827 = vpop.f32.mrb[0].mxu0
    %v1828 = vadd.f32 %v1785, %v1827
    %1829 = vdwg.mxu0
    %v1830 = vmax.f32 %v1650, 0.0
    %v1831 = vmax.f32 %v1652, 0.0
    %v1832 = vmax.f32 %v1822, 0.0
    %v1833 = vmax.f32 %v1824, 0.0
    %v1834 = vmax.f32 %v1654, 0.0
    %v1835 = vmax.f32 %v1656, 0.0
    %v1836 = vmax.f32 %v1826, 0.0
    %v1837 = vmax.f32 %v1828, 0.0
    %v1838 = vpack.c.bf16 %v1834, %v1830
    %v1839 = vpack.c.bf16 %v1835, %v1831
    %v1840 = vpack.c.bf16 %v1836, %v1832
    %v1841 = vpack.c.bf16 %v1837, %v1833
    %v1842 = vld [vmem:[#allocation8] sm:$0xff]
    %v1843 = vld [vmem:[#allocation8 + $0x8] sm:$0xff]
    %v1844 = vld [vmem:[#allocation8 + $0x10] sm:$0xff]
    %v1845 = vld [vmem:[#allocation8 + $0x18] sm:$0xff]
    %v1846 = vld [vmem:[#allocation8 + $0x20] sm:$0xff]
    %v1847 = vld [vmem:[#allocation8 + $0x28] sm:$0xff]
    %v1848 = vld [vmem:[#allocation8 + $0x30] sm:$0xff]
    %v1849 = vld [vmem:[#allocation8 + $0x38] sm:$0xff]
    %v1850 = vld [vmem:[#allocation8 + $0x40] sm:$0xff]
    %v1851 = vld [vmem:[#allocation8 + $0x48] sm:$0xff]
    %v1852 = vld [vmem:[#allocation8 + $0x50] sm:$0xff]
    %v1853 = vld [vmem:[#allocation8 + $0x58] sm:$0xff]
    %v1854 = vld [vmem:[#allocation8 + $0x60] sm:$0xff]
    %v1855 = vld [vmem:[#allocation8 + $0x68] sm:$0xff]
    %v1856 = vld [vmem:[#allocation8 + $0x70] sm:$0xff]
    %v1857 = vld [vmem:[#allocation8 + $0x78] sm:$0xff]
    %v1858 = vld [vmem:[#allocation8 + $0x80] sm:$0xff]
    %v1859 = vld [vmem:[#allocation8 + $0x88] sm:$0xff]
    %v1860 = vld [vmem:[#allocation8 + $0x90] sm:$0xff]
    %v1861 = vld [vmem:[#allocation8 + $0x98] sm:$0xff]
    %v1862 = vld [vmem:[#allocation8 + $0xa0] sm:$0xff]
    %v1863 = vld [vmem:[#allocation8 + $0xa8] sm:$0xff]
    %v1864 = vld [vmem:[#allocation8 + $0xb0] sm:$0xff]
    %v1865 = vld [vmem:[#allocation8 + $0xb8] sm:$0xff]
    %v1866 = vld [vmem:[#allocation8 + $0xc0] sm:$0xff]
    %v1867 = vld [vmem:[#allocation8 + $0xc8] sm:$0xff]
    %v1868 = vld [vmem:[#allocation8 + $0xd0] sm:$0xff]
    %v1869 = vld [vmem:[#allocation8 + $0xd8] sm:$0xff]
    %v1870 = vld [vmem:[#allocation8 + $0xe0] sm:$0xff]
    %v1871 = vld [vmem:[#allocation8 + $0xe8] sm:$0xff]
    %v1872 = vld [vmem:[#allocation8 + $0xf0] sm:$0xff]
    %v1873 = vld [vmem:[#allocation8 + $0xf8] sm:$0xff]
    %v1874 = vld [vmem:[#allocation8 + $0x100] sm:$0xff]
    %v1875 = vld [vmem:[#allocation8 + $0x108] sm:$0xff]
    %v1876 = vld [vmem:[#allocation8 + $0x110] sm:$0xff]
    %v1877 = vld [vmem:[#allocation8 + $0x118] sm:$0xff]
    %v1878 = vld [vmem:[#allocation8 + $0x120] sm:$0xff]
    %v1879 = vld [vmem:[#allocation8 + $0x128] sm:$0xff]
    %v1880 = vld [vmem:[#allocation8 + $0x130] sm:$0xff]
    %v1881 = vld [vmem:[#allocation8 + $0x138] sm:$0xff]
    %v1882 = vld [vmem:[#allocation8 + $0x140] sm:$0xff]
    %v1883 = vld [vmem:[#allocation8 + $0x148] sm:$0xff]
    %v1884 = vld [vmem:[#allocation8 + $0x150] sm:$0xff]
    %v1885 = vld [vmem:[#allocation8 + $0x158] sm:$0xff]
    %v1886 = vld [vmem:[#allocation8 + $0x160] sm:$0xff]
    %v1887 = vld [vmem:[#allocation8 + $0x168] sm:$0xff]
    %v1888 = vld [vmem:[#allocation8 + $0x170] sm:$0xff]
    %v1889 = vld [vmem:[#allocation8 + $0x178] sm:$0xff]
    %v1890 = vld [vmem:[#allocation8 + $0x180] sm:$0xff]
    %v1891 = vld [vmem:[#allocation8 + $0x188] sm:$0xff]
    %v1892 = vld [vmem:[#allocation8 + $0x190] sm:$0xff]
    %v1893 = vld [vmem:[#allocation8 + $0x198] sm:$0xff]
    %v1894 = vld [vmem:[#allocation8 + $0x1a0] sm:$0xff]
    %v1895 = vld [vmem:[#allocation8 + $0x1a8] sm:$0xff]
    %v1896 = vld [vmem:[#allocation8 + $0x1b0] sm:$0xff]
    %v1897 = vld [vmem:[#allocation8 + $0x1b8] sm:$0xff]
    %v1898 = vld [vmem:[#allocation8 + $0x1c0] sm:$0xff]
    %v1899 = vld [vmem:[#allocation8 + $0x1c8] sm:$0xff]
    %v1900 = vld [vmem:[#allocation8 + $0x1d0] sm:$0xff]
    %v1901 = vld [vmem:[#allocation8 + $0x1d8] sm:$0xff]
    %v1902 = vld [vmem:[#allocation8 + $0x1e0] sm:$0xff]
    %v1903 = vld [vmem:[#allocation8 + $0x1e8] sm:$0xff]
    %v1904 = vld [vmem:[#allocation8 + $0x1f0] sm:$0xff]
    %v1905 = vld [vmem:[#allocation8 + $0x1f8] sm:$0xff]
    %v1906 = vld [vmem:[#allocation8 + $0x200] sm:$0xff]
    %v1907 = vld [vmem:[#allocation8 + $0x208] sm:$0xff]
    %v1908 = vld [vmem:[#allocation8 + $0x210] sm:$0xff]
    %v1909 = vld [vmem:[#allocation8 + $0x218] sm:$0xff]
    %v1910 = vld [vmem:[#allocation8 + $0x220] sm:$0xff]
    %v1911 = vld [vmem:[#allocation8 + $0x228] sm:$0xff]
    %v1912 = vld [vmem:[#allocation8 + $0x230] sm:$0xff]
    %v1913 = vld [vmem:[#allocation8 + $0x238] sm:$0xff]
    %v1914 = vld [vmem:[#allocation8 + $0x240] sm:$0xff]
    %v1915 = vld [vmem:[#allocation8 + $0x248] sm:$0xff]
    %v1916 = vld [vmem:[#allocation8 + $0x250] sm:$0xff]
    %v1917 = vld [vmem:[#allocation8 + $0x258] sm:$0xff]
    %v1918 = vld [vmem:[#allocation8 + $0x260] sm:$0xff]
    %v1919 = vld [vmem:[#allocation8 + $0x268] sm:$0xff]
    %v1920 = vld [vmem:[#allocation8 + $0x270] sm:$0xff]
    %v1921 = vld [vmem:[#allocation8 + $0x278] sm:$0xff]
    %v1922 = vld [vmem:[#allocation8 + $0x280] sm:$0xff]
    %v1923 = vld [vmem:[#allocation8 + $0x288] sm:$0xff]
    %v1924 = vld [vmem:[#allocation8 + $0x290] sm:$0xff]
    %v1925 = vld [vmem:[#allocation8 + $0x298] sm:$0xff]
    %v1926 = vld [vmem:[#allocation8 + $0x2a0] sm:$0xff]
    %v1927 = vld [vmem:[#allocation8 + $0x2a8] sm:$0xff]
    %v1928 = vld [vmem:[#allocation8 + $0x2b0] sm:$0xff]
    %v1929 = vld [vmem:[#allocation8 + $0x2b8] sm:$0xff]
    %v1930 = vld [vmem:[#allocation8 + $0x2c0] sm:$0xff]
    %v1931 = vld [vmem:[#allocation8 + $0x2c8] sm:$0xff]
    %v1932 = vld [vmem:[#allocation8 + $0x2d0] sm:$0xff]
    %v1933 = vld [vmem:[#allocation8 + $0x2d8] sm:$0xff]
    %v1934 = vld [vmem:[#allocation8 + $0x2e0] sm:$0xff]
    %v1935 = vld [vmem:[#allocation8 + $0x2e8] sm:$0xff]
    %v1936 = vld [vmem:[#allocation8 + $0x2f0] sm:$0xff]
    %v1937 = vld [vmem:[#allocation8 + $0x2f8] sm:$0xff]
    %v1938 = vld [vmem:[#allocation8 + $0x300] sm:$0xff]
    %v1939 = vld [vmem:[#allocation8 + $0x308] sm:$0xff]
    %v1940 = vld [vmem:[#allocation8 + $0x310] sm:$0xff]
    %v1941 = vld [vmem:[#allocation8 + $0x318] sm:$0xff]
    %v1942 = vld [vmem:[#allocation8 + $0x320] sm:$0xff]
    %v1943 = vld [vmem:[#allocation8 + $0x328] sm:$0xff]
    %v1944 = vld [vmem:[#allocation8 + $0x330] sm:$0xff]
    %v1945 = vld [vmem:[#allocation8 + $0x338] sm:$0xff]
    %v1946 = vld [vmem:[#allocation8 + $0x340] sm:$0xff]
    %v1947 = vld [vmem:[#allocation8 + $0x348] sm:$0xff]
    %v1948 = vld [vmem:[#allocation8 + $0x350] sm:$0xff]
    %v1949 = vld [vmem:[#allocation8 + $0x358] sm:$0xff]
    %v1950 = vld [vmem:[#allocation8 + $0x360] sm:$0xff]
    %v1951 = vld [vmem:[#allocation8 + $0x368] sm:$0xff]
    %v1952 = vld [vmem:[#allocation8 + $0x370] sm:$0xff]
    %v1953 = vld [vmem:[#allocation8 + $0x378] sm:$0xff]
    %v1954 = vld [vmem:[#allocation8 + $0x380] sm:$0xff]
    %v1955 = vld [vmem:[#allocation8 + $0x388] sm:$0xff]
    %v1956 = vld [vmem:[#allocation8 + $0x390] sm:$0xff]
    %v1957 = vld [vmem:[#allocation8 + $0x398] sm:$0xff]
    %v1958 = vld [vmem:[#allocation8 + $0x3a0] sm:$0xff]
    %v1959 = vld [vmem:[#allocation8 + $0x3a8] sm:$0xff]
    %v1960 = vld [vmem:[#allocation8 + $0x3b0] sm:$0xff]
    %v1961 = vld [vmem:[#allocation8 + $0x3b8] sm:$0xff]
    %v1962 = vld [vmem:[#allocation8 + $0x3c0] sm:$0xff]
    %v1963 = vld [vmem:[#allocation8 + $0x3c8] sm:$0xff]
    %v1964 = vld [vmem:[#allocation8 + $0x3d0] sm:$0xff]
    %v1965 = vld [vmem:[#allocation8 + $0x3d8] sm:$0xff]
    %v1966 = vld [vmem:[#allocation8 + $0x3e0] sm:$0xff]
    %v1967 = vld [vmem:[#allocation8 + $0x3e8] sm:$0xff]
    %v1968 = vld [vmem:[#allocation8 + $0x3f0] sm:$0xff]
    %v1969 = vld [vmem:[#allocation8 + $0x3f8] sm:$0xff]
    %v1970 = vld [vmem:[%s4] sm:$0xf]
    %v1972 = vlaneseq
    %v1973 = vshrl.u32 %v1972, 7
    %v1974 = vsub.s32 0, %v1973
    %v1975 = vrot.slane %v1970, %v1974
    %v1976 = vlaneseq
    %v1977 = vshrl.u32 %v1976, 7
    %v1978 = vsub.s32 1, %v1977
    %v1979 = vrot.slane %v1970, %v1978
    %v1980 = vlaneseq
    %v1981 = vshrl.u32 %v1980, 7
    %v1982 = vsub.s32 2, %v1981
    %v1983 = vrot.slane %v1970, %v1982
    %v1984 = vlaneseq
    %v1985 = vshrl.u32 %v1984, 7
    %v1986 = vsub.s32 3, %v1985
    %v1987 = vrot.slane %v1970, %v1986
    %v2120 = vunpack.c.l.b16 %v1842
    %v2121 = vunpack.c.h.b16 %v1842
    %v2122 = vunpack.c.l.b16 %v1843
    %v2123 = vunpack.c.h.b16 %v1843
    %v2124 = vunpack.c.l.b16 %v1844
    %v2125 = vunpack.c.h.b16 %v1844
    %v2126 = vunpack.c.l.b16 %v1845
    %v2127 = vunpack.c.h.b16 %v1845
    %v2128 = vunpack.c.l.b16 %v1846
    %v2129 = vunpack.c.h.b16 %v1846
    %v2130 = vunpack.c.l.b16 %v1847
    %v2131 = vunpack.c.h.b16 %v1847
    %v2132 = vunpack.c.l.b16 %v1848
    %v2133 = vunpack.c.h.b16 %v1848
    %v2134 = vunpack.c.l.b16 %v1849
    %v2135 = vunpack.c.h.b16 %v1849
    %v2136 = vunpack.c.l.b16 %v1850
    %v2137 = vunpack.c.h.b16 %v1850
    %v2138 = vunpack.c.l.b16 %v1851
    %v2139 = vunpack.c.h.b16 %v1851
    %v2140 = vunpack.c.l.b16 %v1852
    %v2141 = vunpack.c.h.b16 %v1852
    %v2142 = vunpack.c.l.b16 %v1853
    %v2143 = vunpack.c.h.b16 %v1853
    %v2144 = vunpack.c.l.b16 %v1854
    %v2145 = vunpack.c.h.b16 %v1854
    %v2146 = vunpack.c.l.b16 %v1855
    %v2147 = vunpack.c.h.b16 %v1855
    %v2148 = vunpack.c.l.b16 %v1856
    %v2149 = vunpack.c.h.b16 %v1856
    %v2150 = vunpack.c.l.b16 %v1857
    %v2151 = vunpack.c.h.b16 %v1857
    %v2152 = vunpack.c.l.b16 %v1858
    %v2153 = vunpack.c.h.b16 %v1858
    %v2154 = vunpack.c.l.b16 %v1859
    %v2155 = vunpack.c.h.b16 %v1859
    %v2156 = vunpack.c.l.b16 %v1860
    %v2157 = vunpack.c.h.b16 %v1860
    %v2158 = vunpack.c.l.b16 %v1861
    %v2159 = vunpack.c.h.b16 %v1861
    %v2160 = vunpack.c.l.b16 %v1862
    %v2161 = vunpack.c.h.b16 %v1862
    %v2162 = vunpack.c.l.b16 %v1863
    %v2163 = vunpack.c.h.b16 %v1863
    %v2164 = vunpack.c.l.b16 %v1864
    %v2165 = vunpack.c.h.b16 %v1864
    %v2166 = vunpack.c.l.b16 %v1865
    %v2167 = vunpack.c.h.b16 %v1865
    %v2168 = vunpack.c.l.b16 %v1866
    %v2169 = vunpack.c.h.b16 %v1866
    %v2170 = vunpack.c.l.b16 %v1867
    %v2171 = vunpack.c.h.b16 %v1867
    %v2172 = vunpack.c.l.b16 %v1868
    %v2173 = vunpack.c.h.b16 %v1868
    %v2174 = vunpack.c.l.b16 %v1869
    %v2175 = vunpack.c.h.b16 %v1869
    %v2176 = vunpack.c.l.b16 %v1870
    %v2177 = vunpack.c.h.b16 %v1870
    %v2178 = vunpack.c.l.b16 %v1871
    %v2179 = vunpack.c.h.b16 %v1871
    %v2180 = vunpack.c.l.b16 %v1872
    %v2181 = vunpack.c.h.b16 %v1872
    %v2182 = vunpack.c.l.b16 %v1873
    %v2183 = vunpack.c.h.b16 %v1873
    %v2184 = vunpack.c.l.b16 %v1874
    %v2185 = vunpack.c.h.b16 %v1874
    %v2186 = vunpack.c.l.b16 %v1875
    %v2187 = vunpack.c.h.b16 %v1875
    %v2188 = vunpack.c.l.b16 %v1876
    %v2189 = vunpack.c.h.b16 %v1876
    %v2190 = vunpack.c.l.b16 %v1877
    %v2191 = vunpack.c.h.b16 %v1877
    %v2192 = vunpack.c.l.b16 %v1878
    %v2193 = vunpack.c.h.b16 %v1878
    %v2194 = vunpack.c.l.b16 %v1879
    %v2195 = vunpack.c.h.b16 %v1879
    %v2196 = vunpack.c.l.b16 %v1880
    %v2197 = vunpack.c.h.b16 %v1880
    %v2198 = vunpack.c.l.b16 %v1881
    %v2199 = vunpack.c.h.b16 %v1881
    %v2200 = vunpack.c.l.b16 %v1882
    %v2201 = vunpack.c.h.b16 %v1882
    %v2202 = vunpack.c.l.b16 %v1883
    %v2203 = vunpack.c.h.b16 %v1883
    %v2204 = vunpack.c.l.b16 %v1884
    %v2205 = vunpack.c.h.b16 %v1884
    %v2206 = vunpack.c.l.b16 %v1885
    %v2207 = vunpack.c.h.b16 %v1885
    %v2208 = vunpack.c.l.b16 %v1886
    %v2209 = vunpack.c.h.b16 %v1886
    %v2210 = vunpack.c.l.b16 %v1887
    %v2211 = vunpack.c.h.b16 %v1887
    %v2212 = vunpack.c.l.b16 %v1888
    %v2213 = vunpack.c.h.b16 %v1888
    %v2214 = vunpack.c.l.b16 %v1889
    %v2215 = vunpack.c.h.b16 %v1889
    %v2216 = vunpack.c.l.b16 %v1890
    %v2217 = vunpack.c.h.b16 %v1890
    %v2218 = vunpack.c.l.b16 %v1891
    %v2219 = vunpack.c.h.b16 %v1891
    %v2220 = vunpack.c.l.b16 %v1892
    %v2221 = vunpack.c.h.b16 %v1892
    %v2222 = vunpack.c.l.b16 %v1893
    %v2223 = vunpack.c.h.b16 %v1893
    %v2224 = vunpack.c.l.b16 %v1894
    %v2225 = vunpack.c.h.b16 %v1894
    %v2226 = vunpack.c.l.b16 %v1895
    %v2227 = vunpack.c.h.b16 %v1895
    %v2228 = vunpack.c.l.b16 %v1896
    %v2229 = vunpack.c.h.b16 %v1896
    %v2230 = vunpack.c.l.b16 %v1897
    %v2231 = vunpack.c.h.b16 %v1897
    %v2232 = vunpack.c.l.b16 %v1898
    %v2233 = vunpack.c.h.b16 %v1898
    %v2234 = vunpack.c.l.b16 %v1899
    %v2235 = vunpack.c.h.b16 %v1899
    %v2236 = vunpack.c.l.b16 %v1900
    %v2237 = vunpack.c.h.b16 %v1900
    %v2238 = vunpack.c.l.b16 %v1901
    %v2239 = vunpack.c.h.b16 %v1901
    %v2240 = vunpack.c.l.b16 %v1902
    %v2241 = vunpack.c.h.b16 %v1902
    %v2242 = vunpack.c.l.b16 %v1903
    %v2243 = vunpack.c.h.b16 %v1903
    %v2244 = vunpack.c.l.b16 %v1904
    %v2245 = vunpack.c.h.b16 %v1904
    %v2246 = vunpack.c.l.b16 %v1905
    %v2247 = vunpack.c.h.b16 %v1905
    %v2248 = vunpack.c.l.b16 %v1906
    %v2249 = vunpack.c.h.b16 %v1906
    %v2250 = vunpack.c.l.b16 %v1907
    %v2251 = vunpack.c.h.b16 %v1907
    %v2252 = vunpack.c.l.b16 %v1908
    %v2253 = vunpack.c.h.b16 %v1908
    %v2254 = vunpack.c.l.b16 %v1909
    %v2255 = vunpack.c.h.b16 %v1909
    %v2256 = vunpack.c.l.b16 %v1910
    %v2257 = vunpack.c.h.b16 %v1910
    %v2258 = vunpack.c.l.b16 %v1911
    %v2259 = vunpack.c.h.b16 %v1911
    %v2260 = vunpack.c.l.b16 %v1912
    %v2261 = vunpack.c.h.b16 %v1912
    %v2262 = vunpack.c.l.b16 %v1913
    %v2263 = vunpack.c.h.b16 %v1913
    %v2264 = vunpack.c.l.b16 %v1914
    %v2265 = vunpack.c.h.b16 %v1914
    %v2266 = vunpack.c.l.b16 %v1915
    %v2267 = vunpack.c.h.b16 %v1915
    %v2268 = vunpack.c.l.b16 %v1916
    %v2269 = vunpack.c.h.b16 %v1916
    %v2270 = vunpack.c.l.b16 %v1917
    %v2271 = vunpack.c.h.b16 %v1917
    %v2272 = vunpack.c.l.b16 %v1918
    %v2273 = vunpack.c.h.b16 %v1918
    %v2274 = vunpack.c.l.b16 %v1919
    %v2275 = vunpack.c.h.b16 %v1919
    %v2276 = vunpack.c.l.b16 %v1920
    %v2277 = vunpack.c.h.b16 %v1920
    %v2278 = vunpack.c.l.b16 %v1921
    %v2279 = vunpack.c.h.b16 %v1921
    %v2280 = vunpack.c.l.b16 %v1922
    %v2281 = vunpack.c.h.b16 %v1922
    %v2282 = vunpack.c.l.b16 %v1923
    %v2283 = vunpack.c.h.b16 %v1923
    %v2284 = vunpack.c.l.b16 %v1924
    %v2285 = vunpack.c.h.b16 %v1924
    %v2286 = vunpack.c.l.b16 %v1925
    %v2287 = vunpack.c.h.b16 %v1925
    %v2288 = vunpack.c.l.b16 %v1926
    %v2289 = vunpack.c.h.b16 %v1926
    %v2290 = vunpack.c.l.b16 %v1927
    %v2291 = vunpack.c.h.b16 %v1927
    %v2292 = vunpack.c.l.b16 %v1928
    %v2293 = vunpack.c.h.b16 %v1928
    %v2294 = vunpack.c.l.b16 %v1929
    %v2295 = vunpack.c.h.b16 %v1929
    %v2296 = vunpack.c.l.b16 %v1930
    %v2297 = vunpack.c.h.b16 %v1930
    %v2298 = vunpack.c.l.b16 %v1931
    %v2299 = vunpack.c.h.b16 %v1931
    %v2300 = vunpack.c.l.b16 %v1932
    %v2301 = vunpack.c.h.b16 %v1932
    %v2302 = vunpack.c.l.b16 %v1933
    %v2303 = vunpack.c.h.b16 %v1933
    %v2304 = vunpack.c.l.b16 %v1934
    %v2305 = vunpack.c.h.b16 %v1934
    %v2306 = vunpack.c.l.b16 %v1935
    %v2307 = vunpack.c.h.b16 %v1935
    %v2308 = vunpack.c.l.b16 %v1936
    %v2309 = vunpack.c.h.b16 %v1936
    %v2310 = vunpack.c.l.b16 %v1937
    %v2311 = vunpack.c.h.b16 %v1937
    %v2312 = vunpack.c.l.b16 %v1938
    %v2313 = vunpack.c.h.b16 %v1938
    %v2314 = vunpack.c.l.b16 %v1939
    %v2315 = vunpack.c.h.b16 %v1939
    %v2316 = vunpack.c.l.b16 %v1940
    %v2317 = vunpack.c.h.b16 %v1940
    %v2318 = vunpack.c.l.b16 %v1941
    %v2319 = vunpack.c.h.b16 %v1941
    %v2320 = vunpack.c.l.b16 %v1942
    %v2321 = vunpack.c.h.b16 %v1942
    %v2322 = vunpack.c.l.b16 %v1943
    %v2323 = vunpack.c.h.b16 %v1943
    %v2324 = vunpack.c.l.b16 %v1944
    %v2325 = vunpack.c.h.b16 %v1944
    %v2326 = vunpack.c.l.b16 %v1945
    %v2327 = vunpack.c.h.b16 %v1945
    %v2328 = vunpack.c.l.b16 %v1946
    %v2329 = vunpack.c.h.b16 %v1946
    %v2330 = vunpack.c.l.b16 %v1947
    %v2331 = vunpack.c.h.b16 %v1947
    %v2332 = vunpack.c.l.b16 %v1948
    %v2333 = vunpack.c.h.b16 %v1948
    %v2334 = vunpack.c.l.b16 %v1949
    %v2335 = vunpack.c.h.b16 %v1949
    %v2336 = vunpack.c.l.b16 %v1950
    %v2337 = vunpack.c.h.b16 %v1950
    %v2338 = vunpack.c.l.b16 %v1951
    %v2339 = vunpack.c.h.b16 %v1951
    %v2340 = vunpack.c.l.b16 %v1952
    %v2341 = vunpack.c.h.b16 %v1952
    %v2342 = vunpack.c.l.b16 %v1953
    %v2343 = vunpack.c.h.b16 %v1953
    %v2344 = vunpack.c.l.b16 %v1954
    %v2345 = vunpack.c.h.b16 %v1954
    %v2346 = vunpack.c.l.b16 %v1955
    %v2347 = vunpack.c.h.b16 %v1955
    %v2348 = vunpack.c.l.b16 %v1956
    %v2349 = vunpack.c.h.b16 %v1956
    %v2350 = vunpack.c.l.b16 %v1957
    %v2351 = vunpack.c.h.b16 %v1957
    %v2352 = vunpack.c.l.b16 %v1958
    %v2353 = vunpack.c.h.b16 %v1958
    %v2354 = vunpack.c.l.b16 %v1959
    %v2355 = vunpack.c.h.b16 %v1959
    %v2356 = vunpack.c.l.b16 %v1960
    %v2357 = vunpack.c.h.b16 %v1960
    %v2358 = vunpack.c.l.b16 %v1961
    %v2359 = vunpack.c.h.b16 %v1961
    %v2360 = vunpack.c.l.b16 %v1962
    %v2361 = vunpack.c.h.b16 %v1962
    %v2362 = vunpack.c.l.b16 %v1963
    %v2363 = vunpack.c.h.b16 %v1963
    %v2364 = vunpack.c.l.b16 %v1964
    %v2365 = vunpack.c.h.b16 %v1964
    %v2366 = vunpack.c.l.b16 %v1965
    %v2367 = vunpack.c.h.b16 %v1965
    %v2368 = vunpack.c.l.b16 %v1966
    %v2369 = vunpack.c.h.b16 %v1966
    %v2370 = vunpack.c.l.b16 %v1967
    %v2371 = vunpack.c.h.b16 %v1967
    %v2372 = vunpack.c.l.b16 %v1968
    %v2373 = vunpack.c.h.b16 %v1968
    %v2374 = vunpack.c.l.b16 %v1969
    %v2375 = vunpack.c.h.b16 %v1969
    %v2376 = vpack.c.b16 %v2124, %v2120
    %v2377 = vpack.c.b16 %v2125, %v2121
    %v2378 = vpack.c.b16 %v2126, %v2122
    %v2379 = vpack.c.b16 %v2127, %v2123
    %v2380 = vpack.c.b16 %v2132, %v2128
    %v2381 = vpack.c.b16 %v2133, %v2129
    %v2382 = vpack.c.b16 %v2134, %v2130
    %v2383 = vpack.c.b16 %v2135, %v2131
    %v2384 = vpack.c.b16 %v2140, %v2136
    %v2385 = vpack.c.b16 %v2141, %v2137
    %v2386 = vpack.c.b16 %v2142, %v2138
    %v2387 = vpack.c.b16 %v2143, %v2139
    %v2388 = vpack.c.b16 %v2148, %v2144
    %v2389 = vpack.c.b16 %v2149, %v2145
    %v2390 = vpack.c.b16 %v2150, %v2146
    %v2391 = vpack.c.b16 %v2151, %v2147
    %v2392 = vpack.c.b16 %v2156, %v2152
    %v2393 = vpack.c.b16 %v2157, %v2153
    %v2394 = vpack.c.b16 %v2158, %v2154
    %v2395 = vpack.c.b16 %v2159, %v2155
    %v2396 = vpack.c.b16 %v2164, %v2160
    %v2397 = vpack.c.b16 %v2165, %v2161
    %v2398 = vpack.c.b16 %v2166, %v2162
    %v2399 = vpack.c.b16 %v2167, %v2163
    %v2400 = vpack.c.b16 %v2172, %v2168
    %v2401 = vpack.c.b16 %v2173, %v2169
    %v2402 = vpack.c.b16 %v2174, %v2170
    %v2403 = vpack.c.b16 %v2175, %v2171
    %v2404 = vpack.c.b16 %v2180, %v2176
    %v2405 = vpack.c.b16 %v2181, %v2177
    %v2406 = vpack.c.b16 %v2182, %v2178
    %v2407 = vpack.c.b16 %v2183, %v2179
    %v2408 = vpack.c.b16 %v2188, %v2184
    %v2409 = vpack.c.b16 %v2189, %v2185
    %v2410 = vpack.c.b16 %v2190, %v2186
    %v2411 = vpack.c.b16 %v2191, %v2187
    %v2412 = vpack.c.b16 %v2196, %v2192
    %v2413 = vpack.c.b16 %v2197, %v2193
    %v2414 = vpack.c.b16 %v2198, %v2194
    %v2415 = vpack.c.b16 %v2199, %v2195
    %v2416 = vpack.c.b16 %v2204, %v2200
    %v2417 = vpack.c.b16 %v2205, %v2201
    %v2418 = vpack.c.b16 %v2206, %v2202
    %v2419 = vpack.c.b16 %v2207, %v2203
    %v2420 = vpack.c.b16 %v2212, %v2208
    %v2421 = vpack.c.b16 %v2213, %v2209
    %v2422 = vpack.c.b16 %v2214, %v2210
    %v2423 = vpack.c.b16 %v2215, %v2211
    %v2424 = vpack.c.b16 %v2220, %v2216
    %v2425 = vpack.c.b16 %v2221, %v2217
    %v2426 = vpack.c.b16 %v2222, %v2218
    %v2427 = vpack.c.b16 %v2223, %v2219
    %v2428 = vpack.c.b16 %v2228, %v2224
    %v2429 = vpack.c.b16 %v2229, %v2225
    %v2430 = vpack.c.b16 %v2230, %v2226
    %v2431 = vpack.c.b16 %v2231, %v2227
    %v2432 = vpack.c.b16 %v2236, %v2232
    %v2433 = vpack.c.b16 %v2237, %v2233
    %v2434 = vpack.c.b16 %v2238, %v2234
    %v2435 = vpack.c.b16 %v2239, %v2235
    %v2436 = vpack.c.b16 %v2244, %v2240
    %v2437 = vpack.c.b16 %v2245, %v2241
    %v2438 = vpack.c.b16 %v2246, %v2242
    %v2439 = vpack.c.b16 %v2247, %v2243
    %v2440 = vpack.c.b16 %v2252, %v2248
    %v2441 = vpack.c.b16 %v2253, %v2249
    %v2442 = vpack.c.b16 %v2254, %v2250
    %v2443 = vpack.c.b16 %v2255, %v2251
    %v2444 = vpack.c.b16 %v2260, %v2256
    %v2445 = vpack.c.b16 %v2261, %v2257
    %v2446 = vpack.c.b16 %v2262, %v2258
    %v2447 = vpack.c.b16 %v2263, %v2259
    %v2448 = vpack.c.b16 %v2268, %v2264
    %v2449 = vpack.c.b16 %v2269, %v2265
    %v2450 = vpack.c.b16 %v2270, %v2266
    %v2451 = vpack.c.b16 %v2271, %v2267
    %v2452 = vpack.c.b16 %v2276, %v2272
    %v2453 = vpack.c.b16 %v2277, %v2273
    %v2454 = vpack.c.b16 %v2278, %v2274
    %v2455 = vpack.c.b16 %v2279, %v2275
    %v2456 = vpack.c.b16 %v2284, %v2280
    %v2457 = vpack.c.b16 %v2285, %v2281
    %v2458 = vpack.c.b16 %v2286, %v2282
    %v2459 = vpack.c.b16 %v2287, %v2283
    %v2460 = vpack.c.b16 %v2292, %v2288
    %v2461 = vpack.c.b16 %v2293, %v2289
    %v2462 = vpack.c.b16 %v2294, %v2290
    %v2463 = vpack.c.b16 %v2295, %v2291
    %v2464 = vpack.c.b16 %v2300, %v2296
    %v2465 = vpack.c.b16 %v2301, %v2297
    %v2466 = vpack.c.b16 %v2302, %v2298
    %v2467 = vpack.c.b16 %v2303, %v2299
    %v2468 = vpack.c.b16 %v2308, %v2304
    %v2469 = vpack.c.b16 %v2309, %v2305
    %v2470 = vpack.c.b16 %v2310, %v2306
    %v2471 = vpack.c.b16 %v2311, %v2307
    %v2472 = vpack.c.b16 %v2316, %v2312
    %v2473 = vpack.c.b16 %v2317, %v2313
    %v2474 = vpack.c.b16 %v2318, %v2314
    %v2475 = vpack.c.b16 %v2319, %v2315
    %v2476 = vpack.c.b16 %v2324, %v2320
    %v2477 = vpack.c.b16 %v2325, %v2321
    %v2478 = vpack.c.b16 %v2326, %v2322
    %v2479 = vpack.c.b16 %v2327, %v2323
    %v2480 = vpack.c.b16 %v2332, %v2328
    %v2481 = vpack.c.b16 %v2333, %v2329
    %v2482 = vpack.c.b16 %v2334, %v2330
    %v2483 = vpack.c.b16 %v2335, %v2331
    %v2484 = vpack.c.b16 %v2340, %v2336
    %v2485 = vpack.c.b16 %v2341, %v2337
    %v2486 = vpack.c.b16 %v2342, %v2338
    %v2487 = vpack.c.b16 %v2343, %v2339
    %v2488 = vpack.c.b16 %v2348, %v2344
    %v2489 = vpack.c.b16 %v2349, %v2345
    %v2490 = vpack.c.b16 %v2350, %v2346
    %v2491 = vpack.c.b16 %v2351, %v2347
    %v2492 = vpack.c.b16 %v2356, %v2352
    %v2493 = vpack.c.b16 %v2357, %v2353
    %v2494 = vpack.c.b16 %v2358, %v2354
    %v2495 = vpack.c.b16 %v2359, %v2355
    %v2496 = vpack.c.b16 %v2364, %v2360
    %v2497 = vpack.c.b16 %v2365, %v2361
    %v2498 = vpack.c.b16 %v2366, %v2362
    %v2499 = vpack.c.b16 %v2367, %v2363
    %v2500 = vpack.c.b16 %v2372, %v2368
    %v2501 = vpack.c.b16 %v2373, %v2369
    %v2502 = vpack.c.b16 %v2374, %v2370
    %v2503 = vpack.c.b16 %v2375, %v2371
    %2632 = vmatprep.subr.bf16.mxu0 %v2377
    %2633 = vmatpush1.bf16.msra.mxu0 %v2376
    %2634 = vmatprep.subr.bf16.mxu0 %v2381
    %2635 = vmatpush1.bf16.msra.mxu0 %v2380
    %2636 = vmatprep.subr.bf16.mxu0 %v2385
    %2637 = vmatpush1.bf16.msra.mxu0 %v2384
    %2638 = vmatprep.subr.bf16.mxu0 %v2389
    %2639 = vmatpush1.bf16.msra.mxu0 %v2388
    %2640 = vmatprep.subr.bf16.mxu0 %v2393
    %2641 = vmatpush1.bf16.msra.mxu0 %v2392
    %2642 = vmatprep.subr.bf16.mxu0 %v2397
    %2643 = vmatpush1.bf16.msra.mxu0 %v2396
    %2644 = vmatprep.subr.bf16.mxu0 %v2401
    %2645 = vmatpush1.bf16.msra.mxu0 %v2400
    %2646 = vmatprep.subr.bf16.mxu0 %v2405
    %2647 = vmatpush1.bf16.msra.mxu0 %v2404
    %2648 = vmatprep.subr.bf16.mxu0 %v2409
    %2649 = vmatpush1.bf16.msra.mxu0 %v2408
    %2650 = vmatprep.subr.bf16.mxu0 %v2413
    %2651 = vmatpush1.bf16.msra.mxu0 %v2412
    %2652 = vmatprep.subr.bf16.mxu0 %v2417
    %2653 = vmatpush1.bf16.msra.mxu0 %v2416
    %2654 = vmatprep.subr.bf16.mxu0 %v2421
    %2655 = vmatpush1.bf16.msra.mxu0 %v2420
    %2656 = vmatprep.subr.bf16.mxu0 %v2425
    %2657 = vmatpush1.bf16.msra.mxu0 %v2424
    %2658 = vmatprep.subr.bf16.mxu0 %v2429
    %2659 = vmatpush1.bf16.msra.mxu0 %v2428
    %2660 = vmatprep.subr.bf16.mxu0 %v2433
    %2661 = vmatpush1.bf16.msra.mxu0 %v2432
    %2662 = vmatprep.subr.bf16.mxu0 %v2437
    %2663 = vmatpush1.bf16.msra.mxu0 %v2436
    %2664 = vmatprep.mubr.bf16.mxu0 %v1839
    %2665 = vmatmul.mubr.bf16.gmra.mrb[0].mxu0 %v1838
    %v2666 = vpop.f32.mrb[0].mxu0
    %v2667 = vadd.f32 %v1975, %v2666
    %v2668 = vpop.f32.mrb[0].mxu0
    %v2669 = vadd.f32 %v1979, %v2668
    %v2670 = vpop.f32.mrb[0].mxu0
    %v2671 = vadd.f32 %v1975, %v2670
    %v2672 = vpop.f32.mrb[0].mxu0
    %v2673 = vadd.f32 %v1979, %v2672
    %2674 = vdwg.mxu0
    %2675 = vmatprep.subr.bf16.mxu0 %v2441
    %2676 = vmatpush1.bf16.msra.mxu0 %v2440
    %2677 = vmatprep.subr.bf16.mxu0 %v2445
    %2678 = vmatpush1.bf16.msra.mxu0 %v2444
    %2679 = vmatprep.subr.bf16.mxu0 %v2449
    %2680 = vmatpush1.bf16.msra.mxu0 %v2448
    %2681 = vmatprep.subr.bf16.mxu0 %v2453
    %2682 = vmatpush1.bf16.msra.mxu0 %v2452
    %2683 = vmatprep.subr.bf16.mxu0 %v2457
    %2684 = vmatpush1.bf16.msra.mxu0 %v2456
    %2685 = vmatprep.subr.bf16.mxu0 %v2461
    %2686 = vmatpush1.bf16.msra.mxu0 %v2460
    %2687 = vmatprep.subr.bf16.mxu0 %v2465
    %2688 = vmatpush1.bf16.msra.mxu0 %v2464
    %2689 = vmatprep.subr.bf16.mxu0 %v2469
    %2690 = vmatpush1.bf16.msra.mxu0 %v2468
    %2691 = vmatprep.subr.bf16.mxu0 %v2473
    %2692 = vmatpush1.bf16.msra.mxu0 %v2472
    %2693 = vmatprep.subr.bf16.mxu0 %v2477
    %2694 = vmatpush1.bf16.msra.mxu0 %v2476
    %2695 = vmatprep.subr.bf16.mxu0 %v2481
    %2696 = vmatpush1.bf16.msra.mxu0 %v2480
    %2697 = vmatprep.subr.bf16.mxu0 %v2485
    %2698 = vmatpush1.bf16.msra.mxu0 %v2484
    %2699 = vmatprep.subr.bf16.mxu0 %v2489
    %2700 = vmatpush1.bf16.msra.mxu0 %v2488
    %2701 = vmatprep.subr.bf16.mxu0 %v2493
    %2702 = vmatpush1.bf16.msra.mxu0 %v2492
    %2703 = vmatprep.subr.bf16.mxu0 %v2497
    %2704 = vmatpush1.bf16.msra.mxu0 %v2496
    %2705 = vmatprep.subr.bf16.mxu0 %v2501
    %2706 = vmatpush1.bf16.msra.mxu0 %v2500
    %2707 = vmatprep.mubr.bf16.mxu0 %v1841
    %2708 = vmatmul.mubr.bf16.gmra.mrb[0].mxu0 %v1840
    %v2709 = vpop.f32.mrb[0].mxu0
    %v2710 = vadd.f32 %v2667, %v2709
    %v2711 = vpop.f32.mrb[0].mxu0
    %v2712 = vadd.f32 %v2669, %v2711
    %v2713 = vpop.f32.mrb[0].mxu0
    %v2714 = vadd.f32 %v2671, %v2713
    %v2715 = vpop.f32.mrb[0].mxu0
    %v2716 = vadd.f32 %v2673, %v2715
    %2717 = vdwg.mxu0
    %2718 = vmatprep.subr.bf16.mxu0 %v2379
    %2719 = vmatpush1.bf16.msra.mxu0 %v2378
    %2720 = vmatprep.subr.bf16.mxu0 %v2383
    %2721 = vmatpush1.bf16.msra.mxu0 %v2382
    %2722 = vmatprep.subr.bf16.mxu0 %v2387
    %2723 = vmatpush1.bf16.msra.mxu0 %v2386
    %2724 = vmatprep.subr.bf16.mxu0 %v2391
    %2725 = vmatpush1.bf16.msra.mxu0 %v2390
    %2726 = vmatprep.subr.bf16.mxu0 %v2395
    %2727 = vmatpush1.bf16.msra.mxu0 %v2394
    %2728 = vmatprep.subr.bf16.mxu0 %v2399
    %2729 = vmatpush1.bf16.msra.mxu0 %v2398
    %2730 = vmatprep.subr.bf16.mxu0 %v2403
    %2731 = vmatpush1.bf16.msra.mxu0 %v2402
    %2732 = vmatprep.subr.bf16.mxu0 %v2407
    %2733 = vmatpush1.bf16.msra.mxu0 %v2406
    %2734 = vmatprep.subr.bf16.mxu0 %v2411
    %2735 = vmatpush1.bf16.msra.mxu0 %v2410
    %2736 = vmatprep.subr.bf16.mxu0 %v2415
    %2737 = vmatpush1.bf16.msra.mxu0 %v2414
    %2738 = vmatprep.subr.bf16.mxu0 %v2419
    %2739 = vmatpush1.bf16.msra.mxu0 %v2418
    %2740 = vmatprep.subr.bf16.mxu0 %v2423
    %2741 = vmatpush1.bf16.msra.mxu0 %v2422
    %2742 = vmatprep.subr.bf16.mxu0 %v2427
    %2743 = vmatpush1.bf16.msra.mxu0 %v2426
    %2744 = vmatprep.subr.bf16.mxu0 %v2431
    %2745 = vmatpush1.bf16.msra.mxu0 %v2430
    %2746 = vmatprep.subr.bf16.mxu0 %v2435
    %2747 = vmatpush1.bf16.msra.mxu0 %v2434
    %2748 = vmatprep.subr.bf16.mxu0 %v2439
    %2749 = vmatpush1.bf16.msra.mxu0 %v2438
    %2750 = vmatprep.mubr.bf16.mxu0 %v1839
    %2751 = vmatmul.mubr.bf16.gmra.mrb[0].mxu0 %v1838
    %v2752 = vpop.f32.mrb[0].mxu0
    %v2753 = vadd.f32 %v1983, %v2752
    %v2754 = vpop.f32.mrb[0].mxu0
    %v2755 = vadd.f32 %v1987, %v2754
    %v2756 = vpop.f32.mrb[0].mxu0
    %v2757 = vadd.f32 %v1983, %v2756
    %v2758 = vpop.f32.mrb[0].mxu0
    %v2759 = vadd.f32 %v1987, %v2758
    %2760 = vdwg.mxu0
    %2761 = vmatprep.subr.bf16.mxu0 %v2443
    %2762 = vmatpush1.bf16.msra.mxu0 %v2442
    %2763 = vmatprep.subr.bf16.mxu0 %v2447
    %2764 = vmatpush1.bf16.msra.mxu0 %v2446
    %2765 = vmatprep.subr.bf16.mxu0 %v2451
    %2766 = vmatpush1.bf16.msra.mxu0 %v2450
    %2767 = vmatprep.subr.bf16.mxu0 %v2455
    %2768 = vmatpush1.bf16.msra.mxu0 %v2454
    %2769 = vmatprep.subr.bf16.mxu0 %v2459
    %2770 = vmatpush1.bf16.msra.mxu0 %v2458
    %2771 = vmatprep.subr.bf16.mxu0 %v2463
    %2772 = vmatpush1.bf16.msra.mxu0 %v2462
    %2773 = vmatprep.subr.bf16.mxu0 %v2467
    %2774 = vmatpush1.bf16.msra.mxu0 %v2466
    %2775 = vmatprep.subr.bf16.mxu0 %v2471
    %2776 = vmatpush1.bf16.msra.mxu0 %v2470
    %2777 = vmatprep.subr.bf16.mxu0 %v2475
    %2778 = vmatpush1.bf16.msra.mxu0 %v2474
    %2779 = vmatprep.subr.bf16.mxu0 %v2479
    %2780 = vmatpush1.bf16.msra.mxu0 %v2478
    %2781 = vmatprep.subr.bf16.mxu0 %v2483
    %2782 = vmatpush1.bf16.msra.mxu0 %v2482
    %2783 = vmatprep.subr.bf16.mxu0 %v2487
    %2784 = vmatpush1.bf16.msra.mxu0 %v2486
    %2785 = vmatprep.subr.bf16.mxu0 %v2491
    %2786 = vmatpush1.bf16.msra.mxu0 %v2490
    %2787 = vmatprep.subr.bf16.mxu0 %v2495
    %2788 = vmatpush1.bf16.msra.mxu0 %v2494
    %2789 = vmatprep.subr.bf16.mxu0 %v2499
    %2790 = vmatpush1.bf16.msra.mxu0 %v2498
    %2791 = vmatprep.subr.bf16.mxu0 %v2503
    %2792 = vmatpush1.bf16.msra.mxu0 %v2502
    %2793 = vmatprep.mubr.bf16.mxu0 %v1841
    %2794 = vmatmul.mubr.bf16.gmra.mrb[0].mxu0 %v1840
    %v2795 = vpop.f32.mrb[0].mxu0
    %v2796 = vadd.f32 %v2753, %v2795
    %v2797 = vpop.f32.mrb[0].mxu0
    %v2798 = vadd.f32 %v2755, %v2797
    %v2799 = vpop.f32.mrb[0].mxu0
    %v2800 = vadd.f32 %v2757, %v2799
    %v2801 = vpop.f32.mrb[0].mxu0
    %v2802 = vadd.f32 %v2759, %v2801
    %2803 = vdwg.mxu0
    %v2804 = vmax.f32 %v2710, 0.0
    %v2805 = vmax.f32 %v2712, 0.0
    %v2806 = vmax.f32 %v2796, 0.0
    %v2807 = vmax.f32 %v2798, 0.0
    %v2808 = vmax.f32 %v2714, 0.0
    %v2809 = vmax.f32 %v2716, 0.0
    %v2810 = vmax.f32 %v2800, 0.0
    %v2811 = vmax.f32 %v2802, 0.0
    %v2812 = vpack.c.bf16 %v2808, %v2804
    %v2813 = vpack.c.bf16 %v2809, %v2805
    %v2814 = vpack.c.bf16 %v2810, %v2806
    %v2815 = vpack.c.bf16 %v2811, %v2807
    %v2816 = vld [vmem:[#allocation9] sm:$0xf]
    %v2817 = vld [vmem:[#allocation9 + $0x4] sm:$0xf]
    %v2818 = vld [vmem:[#allocation9 + $0x8] sm:$0xf]
    %v2819 = vld [vmem:[#allocation9 + $0xc] sm:$0xf]
    %v2820 = vld [vmem:[#allocation9 + $0x10] sm:$0xf]
    %v2821 = vld [vmem:[#allocation9 + $0x14] sm:$0xf]
    %v2822 = vld [vmem:[#allocation9 + $0x18] sm:$0xf]
    %v2823 = vld [vmem:[#allocation9 + $0x1c] sm:$0xf]
    %v2824 = vld [vmem:[#allocation9 + $0x20] sm:$0xf]
    %v2825 = vld [vmem:[#allocation9 + $0x24] sm:$0xf]
    %v2826 = vld [vmem:[#allocation9 + $0x28] sm:$0xf]
    %v2827 = vld [vmem:[#allocation9 + $0x2c] sm:$0xf]
    %v2828 = vld [vmem:[#allocation9 + $0x30] sm:$0xf]
    %v2829 = vld [vmem:[#allocation9 + $0x34] sm:$0xf]
    %v2830 = vld [vmem:[#allocation9 + $0x38] sm:$0xf]
    %v2831 = vld [vmem:[#allocation9 + $0x3c] sm:$0xf]
    %v2832 = vld [vmem:[#allocation9 + $0x40] sm:$0xf]
    %v2833 = vld [vmem:[#allocation9 + $0x44] sm:$0xf]
    %v2834 = vld [vmem:[#allocation9 + $0x48] sm:$0xf]
    %v2835 = vld [vmem:[#allocation9 + $0x4c] sm:$0xf]
    %v2836 = vld [vmem:[#allocation9 + $0x50] sm:$0xf]
    %v2837 = vld [vmem:[#allocation9 + $0x54] sm:$0xf]
    %v2838 = vld [vmem:[#allocation9 + $0x58] sm:$0xf]
    %v2839 = vld [vmem:[#allocation9 + $0x5c] sm:$0xf]
    %v2840 = vld [vmem:[#allocation9 + $0x60] sm:$0xf]
    %v2841 = vld [vmem:[#allocation9 + $0x64] sm:$0xf]
    %v2842 = vld [vmem:[#allocation9 + $0x68] sm:$0xf]
    %v2843 = vld [vmem:[#allocation9 + $0x6c] sm:$0xf]
    %v2844 = vld [vmem:[#allocation9 + $0x70] sm:$0xf]
    %v2845 = vld [vmem:[#allocation9 + $0x74] sm:$0xf]
    %v2846 = vld [vmem:[#allocation9 + $0x78] sm:$0xf]
    %v2847 = vld [vmem:[#allocation9 + $0x7c] sm:$0xf]
    %v2848 = vld [vmem:[#allocation9 + $0x80] sm:$0xf]
    %v2849 = vld [vmem:[#allocation9 + $0x84] sm:$0xf]
    %v2850 = vld [vmem:[#allocation9 + $0x88] sm:$0xf]
    %v2851 = vld [vmem:[#allocation9 + $0x8c] sm:$0xf]
    %v2852 = vld [vmem:[#allocation9 + $0x90] sm:$0xf]
    %v2853 = vld [vmem:[#allocation9 + $0x94] sm:$0xf]
    %v2854 = vld [vmem:[#allocation9 + $0x98] sm:$0xf]
    %v2855 = vld [vmem:[#allocation9 + $0x9c] sm:$0xf]
    %v2856 = vld [vmem:[#allocation9 + $0xa0] sm:$0xf]
    %v2857 = vld [vmem:[#allocation9 + $0xa4] sm:$0xf]
    %v2858 = vld [vmem:[#allocation9 + $0xa8] sm:$0xf]
    %v2859 = vld [vmem:[#allocation9 + $0xac] sm:$0xf]
    %v2860 = vld [vmem:[#allocation9 + $0xb0] sm:$0xf]
    %v2861 = vld [vmem:[#allocation9 + $0xb4] sm:$0xf]
    %v2862 = vld [vmem:[#allocation9 + $0xb8] sm:$0xf]
    %v2863 = vld [vmem:[#allocation9 + $0xbc] sm:$0xf]
    %v2864 = vld [vmem:[#allocation9 + $0xc0] sm:$0xf]
    %v2865 = vld [vmem:[#allocation9 + $0xc4] sm:$0xf]
    %v2866 = vld [vmem:[#allocation9 + $0xc8] sm:$0xf]
    %v2867 = vld [vmem:[#allocation9 + $0xcc] sm:$0xf]
    %v2868 = vld [vmem:[#allocation9 + $0xd0] sm:$0xf]
    %v2869 = vld [vmem:[#allocation9 + $0xd4] sm:$0xf]
    %v2870 = vld [vmem:[#allocation9 + $0xd8] sm:$0xf]
    %v2871 = vld [vmem:[#allocation9 + $0xdc] sm:$0xf]
    %v2872 = vld [vmem:[#allocation9 + $0xe0] sm:$0xf]
    %v2873 = vld [vmem:[#allocation9 + $0xe4] sm:$0xf]
    %v2874 = vld [vmem:[#allocation9 + $0xe8] sm:$0xf]
    %v2875 = vld [vmem:[#allocation9 + $0xec] sm:$0xf]
    %v2876 = vld [vmem:[#allocation9 + $0xf0] sm:$0xf]
    %v2877 = vld [vmem:[#allocation9 + $0xf4] sm:$0xf]
    %v2878 = vld [vmem:[#allocation9 + $0xf8] sm:$0xf]
    %v2879 = vld [vmem:[#allocation9 + $0xfc] sm:$0xf]
    %v2880 = vld [vmem:[%s6] sm:$0x1]
    %v2882 = vlaneseq
    %v2883 = vshrl.u32 %v2882, 7
    %v2884 = vsub.s32 0, %v2883
    %v2885 = vrot.slane %v2880, %v2884
    %v2951 = vunpack.c.l.b16 %v2816
    %v2952 = vunpack.c.l.b16 %v2817
    %v2953 = vunpack.c.l.b16 %v2818
    %v2954 = vunpack.c.l.b16 %v2819
    %v2955 = vunpack.c.l.b16 %v2820
    %v2956 = vunpack.c.l.b16 %v2821
    %v2957 = vunpack.c.l.b16 %v2822
    %v2958 = vunpack.c.l.b16 %v2823
    %v2959 = vunpack.c.l.b16 %v2824
    %v2960 = vunpack.c.l.b16 %v2825
    %v2961 = vunpack.c.l.b16 %v2826
    %v2962 = vunpack.c.l.b16 %v2827
    %v2963 = vunpack.c.l.b16 %v2828
    %v2964 = vunpack.c.l.b16 %v2829
    %v2965 = vunpack.c.l.b16 %v2830
    %v2966 = vunpack.c.l.b16 %v2831
    %v2967 = vunpack.c.l.b16 %v2832
    %v2968 = vunpack.c.l.b16 %v2833
    %v2969 = vunpack.c.l.b16 %v2834
    %v2970 = vunpack.c.l.b16 %v2835
    %v2971 = vunpack.c.l.b16 %v2836
    %v2972 = vunpack.c.l.b16 %v2837
    %v2973 = vunpack.c.l.b16 %v2838
    %v2974 = vunpack.c.l.b16 %v2839
    %v2975 = vunpack.c.l.b16 %v2840
    %v2976 = vunpack.c.l.b16 %v2841
    %v2977 = vunpack.c.l.b16 %v2842
    %v2978 = vunpack.c.l.b16 %v2843
    %v2979 = vunpack.c.l.b16 %v2844
    %v2980 = vunpack.c.l.b16 %v2845
    %v2981 = vunpack.c.l.b16 %v2846
    %v2982 = vunpack.c.l.b16 %v2847
    %v2983 = vunpack.c.l.b16 %v2848
    %v2984 = vunpack.c.l.b16 %v2849
    %v2985 = vunpack.c.l.b16 %v2850
    %v2986 = vunpack.c.l.b16 %v2851
    %v2987 = vunpack.c.l.b16 %v2852
    %v2988 = vunpack.c.l.b16 %v2853
    %v2989 = vunpack.c.l.b16 %v2854
    %v2990 = vunpack.c.l.b16 %v2855
    %v2991 = vunpack.c.l.b16 %v2856
    %v2992 = vunpack.c.l.b16 %v2857
    %v2993 = vunpack.c.l.b16 %v2858
    %v2994 = vunpack.c.l.b16 %v2859
    %v2995 = vunpack.c.l.b16 %v2860
    %v2996 = vunpack.c.l.b16 %v2861
    %v2997 = vunpack.c.l.b16 %v2862
    %v2998 = vunpack.c.l.b16 %v2863
    %v2999 = vunpack.c.l.b16 %v2864
    %v3000 = vunpack.c.l.b16 %v2865
    %v3001 = vunpack.c.l.b16 %v2866
    %v3002 = vunpack.c.l.b16 %v2867
    %v3003 = vunpack.c.l.b16 %v2868
    %v3004 = vunpack.c.l.b16 %v2869
    %v3005 = vunpack.c.l.b16 %v2870
    %v3006 = vunpack.c.l.b16 %v2871
    %v3007 = vunpack.c.l.b16 %v2872
    %v3008 = vunpack.c.l.b16 %v2873
    %v3009 = vunpack.c.l.b16 %v2874
    %v3010 = vunpack.c.l.b16 %v2875
    %v3011 = vunpack.c.l.b16 %v2876
    %v3012 = vunpack.c.l.b16 %v2877
    %v3013 = vunpack.c.l.b16 %v2878
    %v3014 = vunpack.c.l.b16 %v2879
    %v3015 = vpack.c.b16 %v2952, %v2951
    %v3016 = vpack.c.b16 %v2954, %v2953
    %v3017 = vpack.c.b16 %v2956, %v2955
    %v3018 = vpack.c.b16 %v2958, %v2957
    %v3019 = vpack.c.b16 %v2960, %v2959
    %v3020 = vpack.c.b16 %v2962, %v2961
    %v3021 = vpack.c.b16 %v2964, %v2963
    %v3022 = vpack.c.b16 %v2966, %v2965
    %v3023 = vpack.c.b16 %v2968, %v2967
    %v3024 = vpack.c.b16 %v2970, %v2969
    %v3025 = vpack.c.b16 %v2972, %v2971
    %v3026 = vpack.c.b16 %v2974, %v2973
    %v3027 = vpack.c.b16 %v2976, %v2975
    %v3028 = vpack.c.b16 %v2978, %v2977
    %v3029 = vpack.c.b16 %v2980, %v2979
    %v3030 = vpack.c.b16 %v2982, %v2981
    %v3031 = vpack.c.b16 %v2984, %v2983
    %v3032 = vpack.c.b16 %v2986, %v2985
    %v3033 = vpack.c.b16 %v2988, %v2987
    %v3034 = vpack.c.b16 %v2990, %v2989
    %v3035 = vpack.c.b16 %v2992, %v2991
    %v3036 = vpack.c.b16 %v2994, %v2993
    %v3037 = vpack.c.b16 %v2996, %v2995
    %v3038 = vpack.c.b16 %v2998, %v2997
    %v3039 = vpack.c.b16 %v3000, %v2999
    %v3040 = vpack.c.b16 %v3002, %v3001
    %v3041 = vpack.c.b16 %v3004, %v3003
    %v3042 = vpack.c.b16 %v3006, %v3005
    %v3043 = vpack.c.b16 %v3008, %v3007
    %v3044 = vpack.c.b16 %v3010, %v3009
    %v3045 = vpack.c.b16 %v3012, %v3011
    %v3046 = vpack.c.b16 %v3014, %v3013
    %3079 = vmatprep.subr.bf16.mxu0 0
    %3080 = vmatpush1.bf16.msra.mxu0 %v3015
    %3081 = vmatprep.subr.bf16.mxu0 0
    %3082 = vmatpush1.bf16.msra.mxu0 %v3016
    %3083 = vmatprep.subr.bf16.mxu0 0
    %3084 = vmatpush1.bf16.msra.mxu0 %v3017
    %3085 = vmatprep.subr.bf16.mxu0 0
    %3086 = vmatpush1.bf16.msra.mxu0 %v3018
    %3087 = vmatprep.subr.bf16.mxu0 0
    %3088 = vmatpush1.bf16.msra.mxu0 %v3019
    %3089 = vmatprep.subr.bf16.mxu0 0
    %3090 = vmatpush1.bf16.msra.mxu0 %v3020
    %3091 = vmatprep.subr.bf16.mxu0 0
    %3092 = vmatpush1.bf16.msra.mxu0 %v3021
    %3093 = vmatprep.subr.bf16.mxu0 0
    %3094 = vmatpush1.bf16.msra.mxu0 %v3022
    %3095 = vmatprep.subr.bf16.mxu0 0
    %3096 = vmatpush1.bf16.msra.mxu0 %v3023
    %3097 = vmatprep.subr.bf16.mxu0 0
    %3098 = vmatpush1.bf16.msra.mxu0 %v3024
    %3099 = vmatprep.subr.bf16.mxu0 0
    %3100 = vmatpush1.bf16.msra.mxu0 %v3025
    %3101 = vmatprep.subr.bf16.mxu0 0
    %3102 = vmatpush1.bf16.msra.mxu0 %v3026
    %3103 = vmatprep.subr.bf16.mxu0 0
    %3104 = vmatpush1.bf16.msra.mxu0 %v3027
    %3105 = vmatprep.subr.bf16.mxu0 0
    %3106 = vmatpush1.bf16.msra.mxu0 %v3028
    %3107 = vmatprep.subr.bf16.mxu0 0
    %3108 = vmatpush1.bf16.msra.mxu0 %v3029
    %3109 = vmatprep.subr.bf16.mxu0 0
    %3110 = vmatpush1.bf16.msra.mxu0 %v3030
    %3111 = vmatprep.mubr.bf16.mxu0 %v2813
    %3112 = vmatmul.mubr.bf16.gmra.mrb[0].mxu0 %v2812
    %v3113 = vpop.f32.mrb[0].mxu0
    %v3114 = vadd.f32 %v2885, %v3113
    %v3115 = vpop.f32.mrb[0].mxu0
    %v3116 = vpop.f32.mrb[0].mxu0
    %v3117 = vadd.f32 %v2885, %v3116
    %v3118 = vpop.f32.mrb[0].mxu0
    %3119 = vdwg.mxu0
    %3120 = vmatprep.subr.bf16.mxu0 0
    %3121 = vmatpush1.bf16.msra.mxu0 %v3031
    %3122 = vmatprep.subr.bf16.mxu0 0
    %3123 = vmatpush1.bf16.msra.mxu0 %v3032
    %3124 = vmatprep.subr.bf16.mxu0 0
    %3125 = vmatpush1.bf16.msra.mxu0 %v3033
    %3126 = vmatprep.subr.bf16.mxu0 0
    %3127 = vmatpush1.bf16.msra.mxu0 %v3034
    %3128 = vmatprep.subr.bf16.mxu0 0
    %3129 = vmatpush1.bf16.msra.mxu0 %v3035
    %3130 = vmatprep.subr.bf16.mxu0 0
    %3131 = vmatpush1.bf16.msra.mxu0 %v3036
    %3132 = vmatprep.subr.bf16.mxu0 0
    %3133 = vmatpush1.bf16.msra.mxu0 %v3037
    %3134 = vmatprep.subr.bf16.mxu0 0
    %3135 = vmatpush1.bf16.msra.mxu0 %v3038
    %3136 = vmatprep.subr.bf16.mxu0 0
    %3137 = vmatpush1.bf16.msra.mxu0 %v3039
    %3138 = vmatprep.subr.bf16.mxu0 0
    %3139 = vmatpush1.bf16.msra.mxu0 %v3040
    %3140 = vmatprep.subr.bf16.mxu0 0
    %3141 = vmatpush1.bf16.msra.mxu0 %v3041
    %3142 = vmatprep.subr.bf16.mxu0 0
    %3143 = vmatpush1.bf16.msra.mxu0 %v3042
    %3144 = vmatprep.subr.bf16.mxu0 0
    %3145 = vmatpush1.bf16.msra.mxu0 %v3043
    %3146 = vmatprep.subr.bf16.mxu0 0
    %3147 = vmatpush1.bf16.msra.mxu0 %v3044
    %3148 = vmatprep.subr.bf16.mxu0 0
    %3149 = vmatpush1.bf16.msra.mxu0 %v3045
    %3150 = vmatprep.subr.bf16.mxu0 0
    %3151 = vmatpush1.bf16.msra.mxu0 %v3046
    %3152 = vmatprep.mubr.bf16.mxu0 %v2815
    %3153 = vmatmul.mubr.bf16.gmra.mrb[0].mxu0 %v2814
    %v3154 = vpop.f32.mrb[0].mxu0
    %v3155 = vadd.f32 %v3114, %v3154
    %v3156 = vpop.f32.mrb[0].mxu0
    %v3157 = vpop.f32.mrb[0].mxu0
    %v3158 = vadd.f32 %v3117, %v3157
    %v3159 = vpop.f32.mrb[0].mxu0
    %3160 = vdwg.mxu0
    %v3161 = vmax.f32 %v3155, 0.0
    %v3162 = vmax.f32 %v3158, 0.0
    %v3163 = vpack.c.bf16 %v3162, %v3161
    %v3165 = vunpack.c.l.b16 %v3163
    %v3166 = vunpack.c.h.b16 %v3163
    %v3167 = vpack.c.b16 %v3165, %v3165
    %v3168 = vpack.c.b16 %v3166, %v3166
    %3171 = vst [vmem:[#allocation11] sm:$0xf] %v3167
    %3172 = vst [vmem:[#allocation11 + $0x4] sm:$0xf] %v3168
    // Predicated region
    $region46: #{tpu_custom_call.1} parent=1 // pred_check
      _
    $region47: #{tpu_custom_call.1} parent=1 // pred_check_branch
      %3174 = sbr.rel (0) target = $region49
    $region48: #{tpu_custom_call.1} parent=1 // pred_region
      %s3176 = ssub.s32 128, 128
      %3177 = vsyncadd [#allocation5], %s3176
      %s3178 = sshll.u32 [#allocation11], 4
      %s3179 = int_to_ptr.vmem [resolvable:$true] %s3178
      %3184 = dma.vmem_to_hbm [thread:$0]  %s3179, 128, %s7, [#allocation5], 64, 64, 4
    $region49: #{tpu_custom_call.1} parent=1 // pred_fallthru
      _
    // Predicated region
    $region50: #{tpu_custom_call.1} parent=1 // pred_check
      _
    $region51: #{tpu_custom_call.1} parent=1 // pred_check_branch
      %3186 = sbr.rel (0) target = $region53
    $region52: #{tpu_custom_call.1} parent=1 // pred_region
      %3187 = dma.done [#allocation5], 128
    $region53: #{tpu_custom_call.1} parent=1 // pred_fallthru
      _
    %3188 = vsyncpa [#allocation4], 1
    %3189 = vsyncpa [#allocation7], 1
    %3190 = vsyncpa [#allocation10], 1
    %3191 = vsyncpa [#allocation5], 1

</llo_original>
